<compile_context>
chip_gen: v7x
topology: tpu7x:2x2x1
jax: 0.10.0
libtpu: 0.0.40
codegen_flags: <defaults>
</compile_context>

<pallas_src>
import functools

import jax
import jax.numpy as jnp
from jax.experimental import pallas as pl
from jax.experimental.pallas import tpu as pltpu


def _sigmoid(x):
    # exp on EUP (separate bundle slot) + VPU add/div; trivially lowered.
    return 1.0 / (1.0 + jnp.exp(-x))


def gru_kernel(x_ref, wih_ref, bih_ref, whh_ref, bhh_ref,
               out_ref, hn_ref, xp_ref):
    # x_ref:   (1, T*TB, H)  embedded inputs for this batch tile, time-major
    #                        inside the tile (row = t*TB + i), TB % 8 == 0.
    # wih_ref: (H, 3H)       W_ih^T, gates stacked [r | z | n] on the lane axis.
    # bih_ref: (1, 3H)
    # whh_ref: (H, 3H)       W_hh^T.
    # bhh_ref: (1, 3H)
    # out_ref: (1, T*TB, H)  h_t for every timestep (same row layout as x).
    # hn_ref:  (1, TB, H)    final hidden state for this tile.
    # xp_ref:  (T*TB, 3H)    VMEM scratch: cached input projections.
    TB = hn_ref.shape[1]
    H = x_ref.shape[2]
    T = x_ref.shape[1] // TB

    # Fused input projection for every timestep: one big MXU matmul (M = T*TB).
    x = x_ref[0]                                                   # (T*TB, H)
    xp_ref[...] = (
        jnp.dot(x, wih_ref[...], preferred_element_type=jnp.float32)
        + bih_ref[...])

    # Load grid-invariant recurrent weights once, outside the time loop.
    whh = whh_ref[...]
    bhh = bhh_ref[...]

    # Sequential recurrence (true data dependence over time). T is small and
    # static here, so unroll with static, sublane-aligned row slices; for long
    # sequences switch to lax.fori_loop with pl.ds(t * TB, TB) dynamic slices.
    h = jnp.zeros((TB, H), dtype=jnp.float32)
    for t in range(T):
        ts = t * TB                                                # multiple of 8
        g_x = xp_ref[ts:ts + TB, :]                                # (TB, 3H)
        g_h = jnp.dot(h, whh, preferred_element_type=jnp.float32) + bhh
        xr, xz, xn = g_x[:, 0:H], g_x[:, H:2 * H], g_x[:, 2 * H:3 * H]
        hr, hz, hn = g_h[:, 0:H], g_h[:, H:2 * H], g_h[:, 2 * H:3 * H]
        r = _sigmoid(xr + hr)
        z = _sigmoid(xz + hz)
        n = jnp.tanh(xn + r * hn)
        h = (1.0 - z) * n + z * h
        out_ref[0, ts:ts + TB, :] = h.astype(out_ref.dtype)

    hn_ref[0] = h.astype(hn_ref.dtype)


@functools.partial(jax.jit, static_argnames=("batch_tile",))
def encoder_rnn_forward(input_ids, emb_table, w_ih, b_ih, w_hh, b_hh,
                        *, batch_tile=None):
    """EncoderRNN forward (eval mode).

    input_ids: (B, T) int32 token ids
    emb_table: (V, H)   nn.Embedding.weight
    w_ih:      (3H, H)  GRU weight_ih_l0 (gate order r, z, n)
    b_ih:      (3H,)    GRU bias_ih_l0
    w_hh:      (3H, H)  GRU weight_hh_l0
    b_hh:      (3H,)    GRU bias_hh_l0
    Returns (output (B, T, H), hidden (1, B, H)) like the PyTorch module.
    """
    B, T = input_ids.shape
    H = emb_table.shape[1]

    # Pad batch to a sublane multiple so per-timestep row slices are aligned.
    B_pad = ((B + 7) // 8) * 8
    ids = input_ids
    if B_pad != B:
        ids = jnp.concatenate(
            [input_ids, jnp.zeros((B_pad - B, T), input_ids.dtype)], axis=0)

    TB = B_pad if batch_tile is None else batch_tile
    assert B_pad % TB == 0 and TB % 8 == 0, "batch tile must be a multiple of 8"
    J = B_pad // TB

    # Embedding lookup (XLA gather) + eval-mode dropout (identity).
    # TODO(synk): training-mode dropout mask (pltpu.prng_*) is not implemented.
    emb = emb_table[ids].astype(jnp.float32)                      # (B_pad, T, H)

    # Layout plumbing: time-major within each batch tile so the kernel's
    # per-timestep rows are contiguous and aligned; H stays on the lane axis.
    x = emb.reshape(J, TB, T, H).transpose(0, 2, 1, 3).reshape(J, T * TB, H)

    # Pre-transposed weights (canonical kernel layout; in a real model store the
    # parameters this way instead of transposing per call).
    wih_t = w_ih.T                                                # (H, 3H)
    whh_t = w_hh.T                                                # (H, 3H)
    bih2 = b_ih.reshape(1, 3 * H)
    bhh2 = b_hh.reshape(1, 3 * H)

    const2d = lambda j: (0, 0)
    out_tm, h_n = pl.pallas_call(
        gru_kernel,
        out_shape=(jax.ShapeDtypeStruct((J, T * TB, H), jnp.float32),
                   jax.ShapeDtypeStruct((J, TB, H), jnp.float32)),
        grid=(J,),
        in_specs=[
            pl.BlockSpec((1, T * TB, H), lambda j: (j, 0, 0)),
            # Grid-invariant weights/biases (same block every step).
            pl.BlockSpec((H, 3 * H), const2d),
            pl.BlockSpec((1, 3 * H), const2d),
            pl.BlockSpec((H, 3 * H), const2d),
            pl.BlockSpec((1, 3 * H), const2d),
        ],
        out_specs=(pl.BlockSpec((1, T * TB, H), lambda j: (j, 0, 0)),
                   pl.BlockSpec((1, TB, H), lambda j: (j, 0, 0))),
        scratch_shapes=[pltpu.VMEM((T * TB, 3 * H), jnp.float32)],
        compiler_params=pltpu.CompilerParams(
            dimension_semantics=("parallel",)),
    )(x, wih_t, bih2, whh_t, bhh2)

    output = (out_tm.reshape(J, T, TB, H)
              .transpose(0, 2, 1, 3)
              .reshape(B_pad, T, H))[:B]                          # batch_first
    hidden = h_n.reshape(B_pad, H)[:B].reshape(1, B, H)           # (layers=1, B, H)
    return output, hidden


def reference(input_ids, emb_table, w_ih, b_ih, w_hh, b_hh):
    """Pure-JAX PyTorch-equivalent EncoderRNN forward (eval mode)."""
    x = emb_table[input_ids].astype(jnp.float32)                  # (B, T, H)
    B, T, H = x.shape
    h = jnp.zeros((B, H), jnp.float32)
    outs = []
    for t in range(T):
        gi = x[:, t, :] @ w_ih.T + b_ih
        gh = h @ w_hh.T + b_hh
        xr, xz, xn = gi[:, 0:H], gi[:, H:2 * H], gi[:, 2 * H:3 * H]
        hr, hz, hn = gh[:, 0:H], gh[:, H:2 * H], gh[:, 2 * H:3 * H]
        r = _sigmoid(xr + hr)
        z = _sigmoid(xz + hz)
        n = jnp.tanh(xn + r * hn)
        h = (1.0 - z) * n + z * h
        outs.append(h)
    return jnp.stack(outs, axis=1), h.reshape(1, B, H)


if __name__ == "__main__":
    # hidden_size follows the module spec (128); batch/seq/vocab kept small.
    B, T, H, V = 2, 8, 128, 24
    key = jax.random.PRNGKey(0)
    k_ids, k_emb, k_wih, k_bih, k_whh, k_bhh = jax.random.split(key, 6)

    input_ids = jax.random.randint(k_ids, (B, T), 0, V)
    emb_table = jax.random.normal(k_emb, (V, H), dtype=jnp.float32)

    # PyTorch nn.GRU parameter shapes: weight (3H, H), bias (3H,), gates [r,z,n].
    scale = 1.0 / jnp.sqrt(H)
    w_ih = jax.random.uniform(k_wih, (3 * H, H), jnp.float32, -scale, scale)
    b_ih = jax.random.uniform(k_bih, (3 * H,), jnp.float32, -scale, scale)
    w_hh = jax.random.uniform(k_whh, (3 * H, H), jnp.float32, -scale, scale)
    b_hh = jax.random.uniform(k_bhh, (3 * H,), jnp.float32, -scale, scale)

    output, hidden = encoder_rnn_forward(input_ids, emb_table,
                                         w_ih, b_ih, w_hh, b_hh)
    jax.block_until_ready((output, hidden))

    ref_out, ref_hid = reference(input_ids, emb_table, w_ih, b_ih, w_hh, b_hh)
    assert output.shape == (B, T, H) and hidden.shape == (1, B, H)
    assert jnp.allclose(output, ref_out, atol=1e-4, rtol=1e-4)
    assert jnp.allclose(hidden, ref_hid, atol=1e-4, rtol=1e-4)

    print("KERNEL_OK")
</pallas_src>

<mosaic_0001>
module attributes {stable_mosaic.version = 11 : i64} {
  func.func @gru_kernel(%arg0: i32, %arg1: memref<1x64x128xf32, #tpu.memory_space<vmem>>, %arg2: memref<128x384xf32, #tpu.memory_space<vmem>>, %arg3: memref<1x384xf32, #tpu.memory_space<vmem>>, %arg4: memref<128x384xf32, #tpu.memory_space<vmem>>, %arg5: memref<1x384xf32, #tpu.memory_space<vmem>>, %arg6: memref<1x64x128xf32, #tpu.memory_space<vmem>>, %arg7: memref<1x8x128xf32, #tpu.memory_space<vmem>>, %arg8: memref<64x384xf32, #tpu.memory_space<vmem>>) attributes {dimension_semantics = [#tpu.dimension_semantics<parallel>], iteration_bounds = array<i64: 1>, scalar_prefetch = 0 : i64, scratch_operands = 1 : i64, tpu.core_type = #tpu.core_type<tc>, window_params = [{transform_indices = @transform_0, window_bounds = array<i64: 1, 64, 128>}, {pipeline_mode = #tpu.pipeline_mode<synchronous>, transform_indices = @transform_1, window_bounds = array<i64: 128, 384>}, {pipeline_mode = #tpu.pipeline_mode<synchronous>, transform_indices = @transform_2, window_bounds = array<i64: 1, 384>}, {pipeline_mode = #tpu.pipeline_mode<synchronous>, transform_indices = @transform_3, window_bounds = array<i64: 128, 384>}, {pipeline_mode = #tpu.pipeline_mode<synchronous>, transform_indices = @transform_4, window_bounds = array<i64: 1, 384>}, {transform_indices = @transform_5, window_bounds = array<i64: 1, 64, 128>}, {transform_indices = @transform_6, window_bounds = array<i64: 1, 8, 128>}]} {
    %c0 = arith.constant 0 : index
    %c0_0 = arith.constant 0 : index
    %c0_1 = arith.constant 0 : index
    %0 = vector.load %arg1[%c0, %c0_0, %c0_1] : memref<1x64x128xf32, #tpu.memory_space<vmem>>, vector<1x64x128xf32>
    %1 = vector.shape_cast %0 : vector<1x64x128xf32> to vector<64x128xf32>
    %c0_2 = arith.constant 0 : index
    %c0_3 = arith.constant 0 : index
    %2 = vector.load %arg2[%c0_2, %c0_3] : memref<128x384xf32, #tpu.memory_space<vmem>>, vector<128x384xf32>
    %cst = arith.constant dense<0.000000e+00> : vector<64x384xf32>
    %3 = tpu.matmul %1, %2, %cst {dimension_numbers = #tpu.dot_dimension_numbers<[1], [0], [0], [1], [0, 0, 1, 1], [], []>} : vector<64x128xf32>, vector<128x384xf32>, vector<64x384xf32> -> vector<64x384xf32>
    %c0_4 = arith.constant 0 : index
    %c0_5 = arith.constant 0 : index
    %4 = vector.load %arg3[%c0_4, %c0_5] : memref<1x384xf32, #tpu.memory_space<vmem>>, vector<1x384xf32>
    %5 = vector.broadcast %4 : vector<1x384xf32> to vector<64x384xf32>
    %6 = arith.addf %3, %5 : vector<64x384xf32>
    %c0_6 = arith.constant 0 : index
    %c0_7 = arith.constant 0 : index
    %7 = vector.load %arg8[%c0_6, %c0_7] : memref<64x384xf32, #tpu.memory_space<vmem>>, vector<64x384xf32>
    tpu.vector_store %arg8[%c0_6, %c0_7], %6 {strides = array<i32>} : memref<64x384xf32, #tpu.memory_space<vmem>>, vector<64x384xf32>,
    %c0_8 = arith.constant 0 : index
    %c0_9 = arith.constant 0 : index
    %8 = vector.load %arg4[%c0_8, %c0_9] : memref<128x384xf32, #tpu.memory_space<vmem>>, vector<128x384xf32>
    %c0_10 = arith.constant 0 : index
    %c0_11 = arith.constant 0 : index
    %9 = vector.load %arg5[%c0_10, %c0_11] : memref<1x384xf32, #tpu.memory_space<vmem>>, vector<1x384xf32>
    %cst_12 = arith.constant 0.000000e+00 : f32
    %10 = vector.broadcast %cst_12 : f32 to vector<8x128xf32>
    %c0_13 = arith.constant 0 : index
    %c0_14 = arith.constant 0 : index
    %11 = vector.load %arg8[%c0_13, %c0_14] : memref<64x384xf32, #tpu.memory_space<vmem>>, vector<8x384xf32>
    %cst_15 = arith.constant dense<0.000000e+00> : vector<8x384xf32>
    %12 = tpu.matmul %10, %8, %cst_15 {dimension_numbers = #tpu.dot_dimension_numbers<[1], [0], [0], [1], [0, 0, 1, 1], [], []>} : vector<8x128xf32>, vector<128x384xf32>, vector<8x384xf32> -> vector<8x384xf32>
    %13 = vector.broadcast %9 : vector<1x384xf32> to vector<8x384xf32>
    %14 = arith.addf %12, %13 : vector<8x384xf32>
    %15 = vector.extract_strided_slice %11 {offsets = [0, 0], sizes = [8, 128], strides = [1, 1]} : vector<8x384xf32> to vector<8x128xf32>
    %16 = vector.extract_strided_slice %11 {offsets = [0, 128], sizes = [8, 128], strides = [1, 1]} : vector<8x384xf32> to vector<8x128xf32>
    %17 = vector.extract_strided_slice %11 {offsets = [0, 256], sizes = [8, 128], strides = [1, 1]} : vector<8x384xf32> to vector<8x128xf32>
    %18 = vector.extract_strided_slice %14 {offsets = [0, 0], sizes = [8, 128], strides = [1, 1]} : vector<8x384xf32> to vector<8x128xf32>
    %19 = vector.extract_strided_slice %14 {offsets = [0, 128], sizes = [8, 128], strides = [1, 1]} : vector<8x384xf32> to vector<8x128xf32>
    %20 = vector.extract_strided_slice %14 {offsets = [0, 256], sizes = [8, 128], strides = [1, 1]} : vector<8x384xf32> to vector<8x128xf32>
    %21 = arith.addf %15, %18 : vector<8x128xf32>
    %cst_16 = arith.constant 0.000000e+00 : f32
    %22 = vector.broadcast %cst_16 : f32 to vector<8x128xf32>
    %23 = arith.subf %22, %21 : vector<8x128xf32>
    %24 = math.exp %23 : vector<8x128xf32>
    %cst_17 = arith.constant 1.000000e+00 : f32
    %25 = vector.broadcast %cst_17 : f32 to vector<8x128xf32>
    %26 = arith.addf %25, %24 : vector<8x128xf32>
    %cst_18 = arith.constant 1.000000e+00 : f32
    %27 = vector.broadcast %cst_18 : f32 to vector<8x128xf32>
    %28 = arith.divf %27, %26 : vector<8x128xf32>
    %29 = arith.addf %16, %19 : vector<8x128xf32>
    %cst_19 = arith.constant 0.000000e+00 : f32
    %30 = vector.broadcast %cst_19 : f32 to vector<8x128xf32>
    %31 = arith.subf %30, %29 : vector<8x128xf32>
    %32 = math.exp %31 : vector<8x128xf32>
    %cst_20 = arith.constant 1.000000e+00 : f32
    %33 = vector.broadcast %cst_20 : f32 to vector<8x128xf32>
    %34 = arith.addf %33, %32 : vector<8x128xf32>
    %cst_21 = arith.constant 1.000000e+00 : f32
    %35 = vector.broadcast %cst_21 : f32 to vector<8x128xf32>
    %36 = arith.divf %35, %34 : vector<8x128xf32>
    %37 = arith.mulf %28, %20 : vector<8x128xf32>
    %38 = arith.addf %17, %37 : vector<8x128xf32>
    %39 = math.tanh %38 : vector<8x128xf32>
    %cst_22 = arith.constant 1.000000e+00 : f32
    %40 = vector.broadcast %cst_22 : f32 to vector<8x128xf32>
    %41 = arith.subf %40, %36 : vector<8x128xf32>
    %42 = arith.mulf %41, %39 : vector<8x128xf32>
    %43 = arith.mulf %36, %10 : vector<8x128xf32>
    %44 = arith.addf %42, %43 : vector<8x128xf32>
    %c0_23 = arith.constant 0 : index
    %c0_24 = arith.constant 0 : index
    %c0_25 = arith.constant 0 : index
    %45 = vector.load %arg6[%c0_23, %c0_24, %c0_25] : memref<1x64x128xf32, #tpu.memory_space<vmem>>, vector<1x8x128xf32>
    %46 = vector.shape_cast %45 : vector<1x8x128xf32> to vector<8x128xf32>
    %47 = vector.shape_cast %44 : vector<8x128xf32> to vector<1x8x128xf32>
    tpu.vector_store %arg6[%c0_23, %c0_24, %c0_25], %47 {strides = array<i32>} : memref<1x64x128xf32, #tpu.memory_space<vmem>>, vector<1x8x128xf32>,
    %c8 = arith.constant 8 : index
    %c0_26 = arith.constant 0 : index
    %48 = vector.load %arg8[%c8, %c0_26] : memref<64x384xf32, #tpu.memory_space<vmem>>, vector<8x384xf32>
    %cst_27 = arith.constant dense<0.000000e+00> : vector<8x384xf32>
    %49 = tpu.matmul %44, %8, %cst_27 {dimension_numbers = #tpu.dot_dimension_numbers<[1], [0], [0], [1], [0, 0, 1, 1], [], []>} : vector<8x128xf32>, vector<128x384xf32>, vector<8x384xf32> -> vector<8x384xf32>
    %50 = vector.broadcast %9 : vector<1x384xf32> to vector<8x384xf32>
    %51 = arith.addf %49, %50 : vector<8x384xf32>
    %52 = vector.extract_strided_slice %48 {offsets = [0, 0], sizes = [8, 128], strides = [1, 1]} : vector<8x384xf32> to vector<8x128xf32>
    %53 = vector.extract_strided_slice %48 {offsets = [0, 128], sizes = [8, 128], strides = [1, 1]} : vector<8x384xf32> to vector<8x128xf32>
    %54 = vector.extract_strided_slice %48 {offsets = [0, 256], sizes = [8, 128], strides = [1, 1]} : vector<8x384xf32> to vector<8x128xf32>
    %55 = vector.extract_strided_slice %51 {offsets = [0, 0], sizes = [8, 128], strides = [1, 1]} : vector<8x384xf32> to vector<8x128xf32>
    %56 = vector.extract_strided_slice %51 {offsets = [0, 128], sizes = [8, 128], strides = [1, 1]} : vector<8x384xf32> to vector<8x128xf32>
    %57 = vector.extract_strided_slice %51 {offsets = [0, 256], sizes = [8, 128], strides = [1, 1]} : vector<8x384xf32> to vector<8x128xf32>
    %58 = arith.addf %52, %55 : vector<8x128xf32>
    %cst_28 = arith.constant 0.000000e+00 : f32
    %59 = vector.broadcast %cst_28 : f32 to vector<8x128xf32>
    %60 = arith.subf %59, %58 : vector<8x128xf32>
    %61 = math.exp %60 : vector<8x128xf32>
    %cst_29 = arith.constant 1.000000e+00 : f32
    %62 = vector.broadcast %cst_29 : f32 to vector<8x128xf32>
    %63 = arith.addf %62, %61 : vector<8x128xf32>
    %cst_30 = arith.constant 1.000000e+00 : f32
    %64 = vector.broadcast %cst_30 : f32 to vector<8x128xf32>
    %65 = arith.divf %64, %63 : vector<8x128xf32>
    %66 = arith.addf %53, %56 : vector<8x128xf32>
    %cst_31 = arith.constant 0.000000e+00 : f32
    %67 = vector.broadcast %cst_31 : f32 to vector<8x128xf32>
    %68 = arith.subf %67, %66 : vector<8x128xf32>
    %69 = math.exp %68 : vector<8x128xf32>
    %cst_32 = arith.constant 1.000000e+00 : f32
    %70 = vector.broadcast %cst_32 : f32 to vector<8x128xf32>
    %71 = arith.addf %70, %69 : vector<8x128xf32>
    %cst_33 = arith.constant 1.000000e+00 : f32
    %72 = vector.broadcast %cst_33 : f32 to vector<8x128xf32>
    %73 = arith.divf %72, %71 : vector<8x128xf32>
    %74 = arith.mulf %65, %57 : vector<8x128xf32>
    %75 = arith.addf %54, %74 : vector<8x128xf32>
    %76 = math.tanh %75 : vector<8x128xf32>
    %cst_34 = arith.constant 1.000000e+00 : f32
    %77 = vector.broadcast %cst_34 : f32 to vector<8x128xf32>
    %78 = arith.subf %77, %73 : vector<8x128xf32>
    %79 = arith.mulf %78, %76 : vector<8x128xf32>
    %80 = arith.mulf %73, %44 : vector<8x128xf32>
    %81 = arith.addf %79, %80 : vector<8x128xf32>
    %c0_35 = arith.constant 0 : index
    %c8_36 = arith.constant 8 : index
    %c0_37 = arith.constant 0 : index
    %82 = vector.load %arg6[%c0_35, %c8_36, %c0_37] : memref<1x64x128xf32, #tpu.memory_space<vmem>>, vector<1x8x128xf32>
    %83 = vector.shape_cast %82 : vector<1x8x128xf32> to vector<8x128xf32>
    %84 = vector.shape_cast %81 : vector<8x128xf32> to vector<1x8x128xf32>
    tpu.vector_store %arg6[%c0_35, %c8_36, %c0_37], %84 {strides = array<i32>} : memref<1x64x128xf32, #tpu.memory_space<vmem>>, vector<1x8x128xf32>,
    %c16 = arith.constant 16 : index
    %c0_38 = arith.constant 0 : index
    %85 = vector.load %arg8[%c16, %c0_38] : memref<64x384xf32, #tpu.memory_space<vmem>>, vector<8x384xf32>
    %cst_39 = arith.constant dense<0.000000e+00> : vector<8x384xf32>
    %86 = tpu.matmul %81, %8, %cst_39 {dimension_numbers = #tpu.dot_dimension_numbers<[1], [0], [0], [1], [0, 0, 1, 1], [], []>} : vector<8x128xf32>, vector<128x384xf32>, vector<8x384xf32> -> vector<8x384xf32>
    %87 = vector.broadcast %9 : vector<1x384xf32> to vector<8x384xf32>
    %88 = arith.addf %86, %87 : vector<8x384xf32>
    %89 = vector.extract_strided_slice %85 {offsets = [0, 0], sizes = [8, 128], strides = [1, 1]} : vector<8x384xf32> to vector<8x128xf32>
    %90 = vector.extract_strided_slice %85 {offsets = [0, 128], sizes = [8, 128], strides = [1, 1]} : vector<8x384xf32> to vector<8x128xf32>
    %91 = vector.extract_strided_slice %85 {offsets = [0, 256], sizes = [8, 128], strides = [1, 1]} : vector<8x384xf32> to vector<8x128xf32>
    %92 = vector.extract_strided_slice %88 {offsets = [0, 0], sizes = [8, 128], strides = [1, 1]} : vector<8x384xf32> to vector<8x128xf32>
    %93 = vector.extract_strided_slice %88 {offsets = [0, 128], sizes = [8, 128], strides = [1, 1]} : vector<8x384xf32> to vector<8x128xf32>
    %94 = vector.extract_strided_slice %88 {offsets = [0, 256], sizes = [8, 128], strides = [1, 1]} : vector<8x384xf32> to vector<8x128xf32>
    %95 = arith.addf %89, %92 : vector<8x128xf32>
    %cst_40 = arith.constant 0.000000e+00 : f32
    %96 = vector.broadcast %cst_40 : f32 to vector<8x128xf32>
    %97 = arith.subf %96, %95 : vector<8x128xf32>
    %98 = math.exp %97 : vector<8x128xf32>
    %cst_41 = arith.constant 1.000000e+00 : f32
    %99 = vector.broadcast %cst_41 : f32 to vector<8x128xf32>
    %100 = arith.addf %99, %98 : vector<8x128xf32>
    %cst_42 = arith.constant 1.000000e+00 : f32
    %101 = vector.broadcast %cst_42 : f32 to vector<8x128xf32>
    %102 = arith.divf %101, %100 : vector<8x128xf32>
    %103 = arith.addf %90, %93 : vector<8x128xf32>
    %cst_43 = arith.constant 0.000000e+00 : f32
    %104 = vector.broadcast %cst_43 : f32 to vector<8x128xf32>
    %105 = arith.subf %104, %103 : vector<8x128xf32>
    %106 = math.exp %105 : vector<8x128xf32>
    %cst_44 = arith.constant 1.000000e+00 : f32
    %107 = vector.broadcast %cst_44 : f32 to vector<8x128xf32>
    %108 = arith.addf %107, %106 : vector<8x128xf32>
    %cst_45 = arith.constant 1.000000e+00 : f32
    %109 = vector.broadcast %cst_45 : f32 to vector<8x128xf32>
    %110 = arith.divf %109, %108 : vector<8x128xf32>
    %111 = arith.mulf %102, %94 : vector<8x128xf32>
    %112 = arith.addf %91, %111 : vector<8x128xf32>
    %113 = math.tanh %112 : vector<8x128xf32>
    %cst_46 = arith.constant 1.000000e+00 : f32
    %114 = vector.broadcast %cst_46 : f32 to vector<8x128xf32>
    %115 = arith.subf %114, %110 : vector<8x128xf32>
    %116 = arith.mulf %115, %113 : vector<8x128xf32>
    %117 = arith.mulf %110, %81 : vector<8x128xf32>
    %118 = arith.addf %116, %117 : vector<8x128xf32>
    %c0_47 = arith.constant 0 : index
    %c16_48 = arith.constant 16 : index
    %c0_49 = arith.constant 0 : index
    %119 = vector.load %arg6[%c0_47, %c16_48, %c0_49] : memref<1x64x128xf32, #tpu.memory_space<vmem>>, vector<1x8x128xf32>
    %120 = vector.shape_cast %119 : vector<1x8x128xf32> to vector<8x128xf32>
    %121 = vector.shape_cast %118 : vector<8x128xf32> to vector<1x8x128xf32>
    tpu.vector_store %arg6[%c0_47, %c16_48, %c0_49], %121 {strides = array<i32>} : memref<1x64x128xf32, #tpu.memory_space<vmem>>, vector<1x8x128xf32>,
    %c24 = arith.constant 24 : index
    %c0_50 = arith.constant 0 : index
    %122 = vector.load %arg8[%c24, %c0_50] : memref<64x384xf32, #tpu.memory_space<vmem>>, vector<8x384xf32>
    %cst_51 = arith.constant dense<0.000000e+00> : vector<8x384xf32>
    %123 = tpu.matmul %118, %8, %cst_51 {dimension_numbers = #tpu.dot_dimension_numbers<[1], [0], [0], [1], [0, 0, 1, 1], [], []>} : vector<8x128xf32>, vector<128x384xf32>, vector<8x384xf32> -> vector<8x384xf32>
    %124 = vector.broadcast %9 : vector<1x384xf32> to vector<8x384xf32>
    %125 = arith.addf %123, %124 : vector<8x384xf32>
    %126 = vector.extract_strided_slice %122 {offsets = [0, 0], sizes = [8, 128], strides = [1, 1]} : vector<8x384xf32> to vector<8x128xf32>
    %127 = vector.extract_strided_slice %122 {offsets = [0, 128], sizes = [8, 128], strides = [1, 1]} : vector<8x384xf32> to vector<8x128xf32>
    %128 = vector.extract_strided_slice %122 {offsets = [0, 256], sizes = [8, 128], strides = [1, 1]} : vector<8x384xf32> to vector<8x128xf32>
    %129 = vector.extract_strided_slice %125 {offsets = [0, 0], sizes = [8, 128], strides = [1, 1]} : vector<8x384xf32> to vector<8x128xf32>
    %130 = vector.extract_strided_slice %125 {offsets = [0, 128], sizes = [8, 128], strides = [1, 1]} : vector<8x384xf32> to vector<8x128xf32>
    %131 = vector.extract_strided_slice %125 {offsets = [0, 256], sizes = [8, 128], strides = [1, 1]} : vector<8x384xf32> to vector<8x128xf32>
    %132 = arith.addf %126, %129 : vector<8x128xf32>
    %cst_52 = arith.constant 0.000000e+00 : f32
    %133 = vector.broadcast %cst_52 : f32 to vector<8x128xf32>
    %134 = arith.subf %133, %132 : vector<8x128xf32>
    %135 = math.exp %134 : vector<8x128xf32>
    %cst_53 = arith.constant 1.000000e+00 : f32
    %136 = vector.broadcast %cst_53 : f32 to vector<8x128xf32>
    %137 = arith.addf %136, %135 : vector<8x128xf32>
    %cst_54 = arith.constant 1.000000e+00 : f32
    %138 = vector.broadcast %cst_54 : f32 to vector<8x128xf32>
    %139 = arith.divf %138, %137 : vector<8x128xf32>
    %140 = arith.addf %127, %130 : vector<8x128xf32>
    %cst_55 = arith.constant 0.000000e+00 : f32
    %141 = vector.broadcast %cst_55 : f32 to vector<8x128xf32>
    %142 = arith.subf %141, %140 : vector<8x128xf32>
    %143 = math.exp %142 : vector<8x128xf32>
    %cst_56 = arith.constant 1.000000e+00 : f32
    %144 = vector.broadcast %cst_56 : f32 to vector<8x128xf32>
    %145 = arith.addf %144, %143 : vector<8x128xf32>
    %cst_57 = arith.constant 1.000000e+00 : f32
    %146 = vector.broadcast %cst_57 : f32 to vector<8x128xf32>
    %147 = arith.divf %146, %145 : vector<8x128xf32>
    %148 = arith.mulf %139, %131 : vector<8x128xf32>
    %149 = arith.addf %128, %148 : vector<8x128xf32>
    %150 = math.tanh %149 : vector<8x128xf32>
    %cst_58 = arith.constant 1.000000e+00 : f32
    %151 = vector.broadcast %cst_58 : f32 to vector<8x128xf32>
    %152 = arith.subf %151, %147 : vector<8x128xf32>
    %153 = arith.mulf %152, %150 : vector<8x128xf32>
    %154 = arith.mulf %147, %118 : vector<8x128xf32>
    %155 = arith.addf %153, %154 : vector<8x128xf32>
    %c0_59 = arith.constant 0 : index
    %c24_60 = arith.constant 24 : index
    %c0_61 = arith.constant 0 : index
    %156 = vector.load %arg6[%c0_59, %c24_60, %c0_61] : memref<1x64x128xf32, #tpu.memory_space<vmem>>, vector<1x8x128xf32>
    %157 = vector.shape_cast %156 : vector<1x8x128xf32> to vector<8x128xf32>
    %158 = vector.shape_cast %155 : vector<8x128xf32> to vector<1x8x128xf32>
    tpu.vector_store %arg6[%c0_59, %c24_60, %c0_61], %158 {strides = array<i32>} : memref<1x64x128xf32, #tpu.memory_space<vmem>>, vector<1x8x128xf32>,
    %c32 = arith.constant 32 : index
    %c0_62 = arith.constant 0 : index
    %159 = vector.load %arg8[%c32, %c0_62] : memref<64x384xf32, #tpu.memory_space<vmem>>, vector<8x384xf32>
    %cst_63 = arith.constant dense<0.000000e+00> : vector<8x384xf32>
    %160 = tpu.matmul %155, %8, %cst_63 {dimension_numbers = #tpu.dot_dimension_numbers<[1], [0], [0], [1], [0, 0, 1, 1], [], []>} : vector<8x128xf32>, vector<128x384xf32>, vector<8x384xf32> -> vector<8x384xf32>
    %161 = vector.broadcast %9 : vector<1x384xf32> to vector<8x384xf32>
    %162 = arith.addf %160, %161 : vector<8x384xf32>
    %163 = vector.extract_strided_slice %159 {offsets = [0, 0], sizes = [8, 128], strides = [1, 1]} : vector<8x384xf32> to vector<8x128xf32>
    %164 = vector.extract_strided_slice %159 {offsets = [0, 128], sizes = [8, 128], strides = [1, 1]} : vector<8x384xf32> to vector<8x128xf32>
    %165 = vector.extract_strided_slice %159 {offsets = [0, 256], sizes = [8, 128], strides = [1, 1]} : vector<8x384xf32> to vector<8x128xf32>
    %166 = vector.extract_strided_slice %162 {offsets = [0, 0], sizes = [8, 128], strides = [1, 1]} : vector<8x384xf32> to vector<8x128xf32>
    %167 = vector.extract_strided_slice %162 {offsets = [0, 128], sizes = [8, 128], strides = [1, 1]} : vector<8x384xf32> to vector<8x128xf32>
    %168 = vector.extract_strided_slice %162 {offsets = [0, 256], sizes = [8, 128], strides = [1, 1]} : vector<8x384xf32> to vector<8x128xf32>
    %169 = arith.addf %163, %166 : vector<8x128xf32>
    %cst_64 = arith.constant 0.000000e+00 : f32
    %170 = vector.broadcast %cst_64 : f32 to vector<8x128xf32>
    %171 = arith.subf %170, %169 : vector<8x128xf32>
    %172 = math.exp %171 : vector<8x128xf32>
    %cst_65 = arith.constant 1.000000e+00 : f32
    %173 = vector.broadcast %cst_65 : f32 to vector<8x128xf32>
    %174 = arith.addf %173, %172 : vector<8x128xf32>
    %cst_66 = arith.constant 1.000000e+00 : f32
    %175 = vector.broadcast %cst_66 : f32 to vector<8x128xf32>
    %176 = arith.divf %175, %174 : vector<8x128xf32>
    %177 = arith.addf %164, %167 : vector<8x128xf32>
    %cst_67 = arith.constant 0.000000e+00 : f32
    %178 = vector.broadcast %cst_67 : f32 to vector<8x128xf32>
    %179 = arith.subf %178, %177 : vector<8x128xf32>
    %180 = math.exp %179 : vector<8x128xf32>
    %cst_68 = arith.constant 1.000000e+00 : f32
    %181 = vector.broadcast %cst_68 : f32 to vector<8x128xf32>
    %182 = arith.addf %181, %180 : vector<8x128xf32>
    %cst_69 = arith.constant 1.000000e+00 : f32
    %183 = vector.broadcast %cst_69 : f32 to vector<8x128xf32>
    %184 = arith.divf %183, %182 : vector<8x128xf32>
    %185 = arith.mulf %176, %168 : vector<8x128xf32>
    %186 = arith.addf %165, %185 : vector<8x128xf32>
    %187 = math.tanh %186 : vector<8x128xf32>
    %cst_70 = arith.constant 1.000000e+00 : f32
    %188 = vector.broadcast %cst_70 : f32 to vector<8x128xf32>
    %189 = arith.subf %188, %184 : vector<8x128xf32>
    %190 = arith.mulf %189, %187 : vector<8x128xf32>
    %191 = arith.mulf %184, %155 : vector<8x128xf32>
    %192 = arith.addf %190, %191 : vector<8x128xf32>
    %c0_71 = arith.constant 0 : index
    %c32_72 = arith.constant 32 : index
    %c0_73 = arith.constant 0 : index
    %193 = vector.load %arg6[%c0_71, %c32_72, %c0_73] : memref<1x64x128xf32, #tpu.memory_space<vmem>>, vector<1x8x128xf32>
    %194 = vector.shape_cast %193 : vector<1x8x128xf32> to vector<8x128xf32>
    %195 = vector.shape_cast %192 : vector<8x128xf32> to vector<1x8x128xf32>
    tpu.vector_store %arg6[%c0_71, %c32_72, %c0_73], %195 {strides = array<i32>} : memref<1x64x128xf32, #tpu.memory_space<vmem>>, vector<1x8x128xf32>,
    %c40 = arith.constant 40 : index
    %c0_74 = arith.constant 0 : index
    %196 = vector.load %arg8[%c40, %c0_74] : memref<64x384xf32, #tpu.memory_space<vmem>>, vector<8x384xf32>
    %cst_75 = arith.constant dense<0.000000e+00> : vector<8x384xf32>
    %197 = tpu.matmul %192, %8, %cst_75 {dimension_numbers = #tpu.dot_dimension_numbers<[1], [0], [0], [1], [0, 0, 1, 1], [], []>} : vector<8x128xf32>, vector<128x384xf32>, vector<8x384xf32> -> vector<8x384xf32>
    %198 = vector.broadcast %9 : vector<1x384xf32> to vector<8x384xf32>
    %199 = arith.addf %197, %198 : vector<8x384xf32>
    %200 = vector.extract_strided_slice %196 {offsets = [0, 0], sizes = [8, 128], strides = [1, 1]} : vector<8x384xf32> to vector<8x128xf32>
    %201 = vector.extract_strided_slice %196 {offsets = [0, 128], sizes = [8, 128], strides = [1, 1]} : vector<8x384xf32> to vector<8x128xf32>
    %202 = vector.extract_strided_slice %196 {offsets = [0, 256], sizes = [8, 128], strides = [1, 1]} : vector<8x384xf32> to vector<8x128xf32>
    %203 = vector.extract_strided_slice %199 {offsets = [0, 0], sizes = [8, 128], strides = [1, 1]} : vector<8x384xf32> to vector<8x128xf32>
    %204 = vector.extract_strided_slice %199 {offsets = [0, 128], sizes = [8, 128], strides = [1, 1]} : vector<8x384xf32> to vector<8x128xf32>
    %205 = vector.extract_strided_slice %199 {offsets = [0, 256], sizes = [8, 128], strides = [1, 1]} : vector<8x384xf32> to vector<8x128xf32>
    %206 = arith.addf %200, %203 : vector<8x128xf32>
    %cst_76 = arith.constant 0.000000e+00 : f32
    %207 = vector.broadcast %cst_76 : f32 to vector<8x128xf32>
    %208 = arith.subf %207, %206 : vector<8x128xf32>
    %209 = math.exp %208 : vector<8x128xf32>
    %cst_77 = arith.constant 1.000000e+00 : f32
    %210 = vector.broadcast %cst_77 : f32 to vector<8x128xf32>
    %211 = arith.addf %210, %209 : vector<8x128xf32>
    %cst_78 = arith.constant 1.000000e+00 : f32
    %212 = vector.broadcast %cst_78 : f32 to vector<8x128xf32>
    %213 = arith.divf %212, %211 : vector<8x128xf32>
    %214 = arith.addf %201, %204 : vector<8x128xf32>
    %cst_79 = arith.constant 0.000000e+00 : f32
    %215 = vector.broadcast %cst_79 : f32 to vector<8x128xf32>
    %216 = arith.subf %215, %214 : vector<8x128xf32>
    %217 = math.exp %216 : vector<8x128xf32>
    %cst_80 = arith.constant 1.000000e+00 : f32
    %218 = vector.broadcast %cst_80 : f32 to vector<8x128xf32>
    %219 = arith.addf %218, %217 : vector<8x128xf32>
    %cst_81 = arith.constant 1.000000e+00 : f32
    %220 = vector.broadcast %cst_81 : f32 to vector<8x128xf32>
    %221 = arith.divf %220, %219 : vector<8x128xf32>
    %222 = arith.mulf %213, %205 : vector<8x128xf32>
    %223 = arith.addf %202, %222 : vector<8x128xf32>
    %224 = math.tanh %223 : vector<8x128xf32>
    %cst_82 = arith.constant 1.000000e+00 : f32
    %225 = vector.broadcast %cst_82 : f32 to vector<8x128xf32>
    %226 = arith.subf %225, %221 : vector<8x128xf32>
    %227 = arith.mulf %226, %224 : vector<8x128xf32>
    %228 = arith.mulf %221, %192 : vector<8x128xf32>
    %229 = arith.addf %227, %228 : vector<8x128xf32>
    %c0_83 = arith.constant 0 : index
    %c40_84 = arith.constant 40 : index
    %c0_85 = arith.constant 0 : index
    %230 = vector.load %arg6[%c0_83, %c40_84, %c0_85] : memref<1x64x128xf32, #tpu.memory_space<vmem>>, vector<1x8x128xf32>
    %231 = vector.shape_cast %230 : vector<1x8x128xf32> to vector<8x128xf32>
    %232 = vector.shape_cast %229 : vector<8x128xf32> to vector<1x8x128xf32>
    tpu.vector_store %arg6[%c0_83, %c40_84, %c0_85], %232 {strides = array<i32>} : memref<1x64x128xf32, #tpu.memory_space<vmem>>, vector<1x8x128xf32>,
    %c48 = arith.constant 48 : index
    %c0_86 = arith.constant 0 : index
    %233 = vector.load %arg8[%c48, %c0_86] : memref<64x384xf32, #tpu.memory_space<vmem>>, vector<8x384xf32>
    %cst_87 = arith.constant dense<0.000000e+00> : vector<8x384xf32>
    %234 = tpu.matmul %229, %8, %cst_87 {dimension_numbers = #tpu.dot_dimension_numbers<[1], [0], [0], [1], [0, 0, 1, 1], [], []>} : vector<8x128xf32>, vector<128x384xf32>, vector<8x384xf32> -> vector<8x384xf32>
    %235 = vector.broadcast %9 : vector<1x384xf32> to vector<8x384xf32>
    %236 = arith.addf %234, %235 : vector<8x384xf32>
    %237 = vector.extract_strided_slice %233 {offsets = [0, 0], sizes = [8, 128], strides = [1, 1]} : vector<8x384xf32> to vector<8x128xf32>
    %238 = vector.extract_strided_slice %233 {offsets = [0, 128], sizes = [8, 128], strides = [1, 1]} : vector<8x384xf32> to vector<8x128xf32>
    %239 = vector.extract_strided_slice %233 {offsets = [0, 256], sizes = [8, 128], strides = [1, 1]} : vector<8x384xf32> to vector<8x128xf32>
    %240 = vector.extract_strided_slice %236 {offsets = [0, 0], sizes = [8, 128], strides = [1, 1]} : vector<8x384xf32> to vector<8x128xf32>
    %241 = vector.extract_strided_slice %236 {offsets = [0, 128], sizes = [8, 128], strides = [1, 1]} : vector<8x384xf32> to vector<8x128xf32>
    %242 = vector.extract_strided_slice %236 {offsets = [0, 256], sizes = [8, 128], strides = [1, 1]} : vector<8x384xf32> to vector<8x128xf32>
    %243 = arith.addf %237, %240 : vector<8x128xf32>
    %cst_88 = arith.constant 0.000000e+00 : f32
    %244 = vector.broadcast %cst_88 : f32 to vector<8x128xf32>
    %245 = arith.subf %244, %243 : vector<8x128xf32>
    %246 = math.exp %245 : vector<8x128xf32>
    %cst_89 = arith.constant 1.000000e+00 : f32
    %247 = vector.broadcast %cst_89 : f32 to vector<8x128xf32>
    %248 = arith.addf %247, %246 : vector<8x128xf32>
    %cst_90 = arith.constant 1.000000e+00 : f32
    %249 = vector.broadcast %cst_90 : f32 to vector<8x128xf32>
    %250 = arith.divf %249, %248 : vector<8x128xf32>
    %251 = arith.addf %238, %241 : vector<8x128xf32>
    %cst_91 = arith.constant 0.000000e+00 : f32
    %252 = vector.broadcast %cst_91 : f32 to vector<8x128xf32>
    %253 = arith.subf %252, %251 : vector<8x128xf32>
    %254 = math.exp %253 : vector<8x128xf32>
    %cst_92 = arith.constant 1.000000e+00 : f32
    %255 = vector.broadcast %cst_92 : f32 to vector<8x128xf32>
    %256 = arith.addf %255, %254 : vector<8x128xf32>
    %cst_93 = arith.constant 1.000000e+00 : f32
    %257 = vector.broadcast %cst_93 : f32 to vector<8x128xf32>
    %258 = arith.divf %257, %256 : vector<8x128xf32>
    %259 = arith.mulf %250, %242 : vector<8x128xf32>
    %260 = arith.addf %239, %259 : vector<8x128xf32>
    %261 = math.tanh %260 : vector<8x128xf32>
    %cst_94 = arith.constant 1.000000e+00 : f32
    %262 = vector.broadcast %cst_94 : f32 to vector<8x128xf32>
    %263 = arith.subf %262, %258 : vector<8x128xf32>
    %264 = arith.mulf %263, %261 : vector<8x128xf32>
    %265 = arith.mulf %258, %229 : vector<8x128xf32>
    %266 = arith.addf %264, %265 : vector<8x128xf32>
    %c0_95 = arith.constant 0 : index
    %c48_96 = arith.constant 48 : index
    %c0_97 = arith.constant 0 : index
    %267 = vector.load %arg6[%c0_95, %c48_96, %c0_97] : memref<1x64x128xf32, #tpu.memory_space<vmem>>, vector<1x8x128xf32>
    %268 = vector.shape_cast %267 : vector<1x8x128xf32> to vector<8x128xf32>
    %269 = vector.shape_cast %266 : vector<8x128xf32> to vector<1x8x128xf32>
    tpu.vector_store %arg6[%c0_95, %c48_96, %c0_97], %269 {strides = array<i32>} : memref<1x64x128xf32, #tpu.memory_space<vmem>>, vector<1x8x128xf32>,
    %c56 = arith.constant 56 : index
    %c0_98 = arith.constant 0 : index
    %270 = vector.load %arg8[%c56, %c0_98] : memref<64x384xf32, #tpu.memory_space<vmem>>, vector<8x384xf32>
    %cst_99 = arith.constant dense<0.000000e+00> : vector<8x384xf32>
    %271 = tpu.matmul %266, %8, %cst_99 {dimension_numbers = #tpu.dot_dimension_numbers<[1], [0], [0], [1], [0, 0, 1, 1], [], []>} : vector<8x128xf32>, vector<128x384xf32>, vector<8x384xf32> -> vector<8x384xf32>
    %272 = vector.broadcast %9 : vector<1x384xf32> to vector<8x384xf32>
    %273 = arith.addf %271, %272 : vector<8x384xf32>
    %274 = vector.extract_strided_slice %270 {offsets = [0, 0], sizes = [8, 128], strides = [1, 1]} : vector<8x384xf32> to vector<8x128xf32>
    %275 = vector.extract_strided_slice %270 {offsets = [0, 128], sizes = [8, 128], strides = [1, 1]} : vector<8x384xf32> to vector<8x128xf32>
    %276 = vector.extract_strided_slice %270 {offsets = [0, 256], sizes = [8, 128], strides = [1, 1]} : vector<8x384xf32> to vector<8x128xf32>
    %277 = vector.extract_strided_slice %273 {offsets = [0, 0], sizes = [8, 128], strides = [1, 1]} : vector<8x384xf32> to vector<8x128xf32>
    %278 = vector.extract_strided_slice %273 {offsets = [0, 128], sizes = [8, 128], strides = [1, 1]} : vector<8x384xf32> to vector<8x128xf32>
    %279 = vector.extract_strided_slice %273 {offsets = [0, 256], sizes = [8, 128], strides = [1, 1]} : vector<8x384xf32> to vector<8x128xf32>
    %280 = arith.addf %274, %277 : vector<8x128xf32>
    %cst_100 = arith.constant 0.000000e+00 : f32
    %281 = vector.broadcast %cst_100 : f32 to vector<8x128xf32>
    %282 = arith.subf %281, %280 : vector<8x128xf32>
    %283 = math.exp %282 : vector<8x128xf32>
    %cst_101 = arith.constant 1.000000e+00 : f32
    %284 = vector.broadcast %cst_101 : f32 to vector<8x128xf32>
    %285 = arith.addf %284, %283 : vector<8x128xf32>
    %cst_102 = arith.constant 1.000000e+00 : f32
    %286 = vector.broadcast %cst_102 : f32 to vector<8x128xf32>
    %287 = arith.divf %286, %285 : vector<8x128xf32>
    %288 = arith.addf %275, %278 : vector<8x128xf32>
    %cst_103 = arith.constant 0.000000e+00 : f32
    %289 = vector.broadcast %cst_103 : f32 to vector<8x128xf32>
    %290 = arith.subf %289, %288 : vector<8x128xf32>
    %291 = math.exp %290 : vector<8x128xf32>
    %cst_104 = arith.constant 1.000000e+00 : f32
    %292 = vector.broadcast %cst_104 : f32 to vector<8x128xf32>
    %293 = arith.addf %292, %291 : vector<8x128xf32>
    %cst_105 = arith.constant 1.000000e+00 : f32
    %294 = vector.broadcast %cst_105 : f32 to vector<8x128xf32>
    %295 = arith.divf %294, %293 : vector<8x128xf32>
    %296 = arith.mulf %287, %279 : vector<8x128xf32>
    %297 = arith.addf %276, %296 : vector<8x128xf32>
    %298 = math.tanh %297 : vector<8x128xf32>
    %cst_106 = arith.constant 1.000000e+00 : f32
    %299 = vector.broadcast %cst_106 : f32 to vector<8x128xf32>
    %300 = arith.subf %299, %295 : vector<8x128xf32>
    %301 = arith.mulf %300, %298 : vector<8x128xf32>
    %302 = arith.mulf %295, %266 : vector<8x128xf32>
    %303 = arith.addf %301, %302 : vector<8x128xf32>
    %c0_107 = arith.constant 0 : index
    %c56_108 = arith.constant 56 : index
    %c0_109 = arith.constant 0 : index
    %304 = vector.load %arg6[%c0_107, %c56_108, %c0_109] : memref<1x64x128xf32, #tpu.memory_space<vmem>>, vector<1x8x128xf32>
    %305 = vector.shape_cast %304 : vector<1x8x128xf32> to vector<8x128xf32>
    %306 = vector.shape_cast %303 : vector<8x128xf32> to vector<1x8x128xf32>
    tpu.vector_store %arg6[%c0_107, %c56_108, %c0_109], %306 {strides = array<i32>} : memref<1x64x128xf32, #tpu.memory_space<vmem>>, vector<1x8x128xf32>,
    %c0_110 = arith.constant 0 : index
    %c0_111 = arith.constant 0 : index
    %c0_112 = arith.constant 0 : index
    %307 = vector.load %arg7[%c0_110, %c0_111, %c0_112] : memref<1x8x128xf32, #tpu.memory_space<vmem>>, vector<1x8x128xf32>
    %308 = vector.shape_cast %307 : vector<1x8x128xf32> to vector<8x128xf32>
    %309 = vector.shape_cast %303 : vector<8x128xf32> to vector<1x8x128xf32>
    tpu.vector_store %arg7[%c0_110, %c0_111, %c0_112], %309 {strides = array<i32>} : memref<1x8x128xf32, #tpu.memory_space<vmem>>, vector<1x8x128xf32>,
    return
  }
  func.func @transform_0(%arg0: i32) -> (i32, i32, i32) {
    %c0_i32 = arith.constant 0 : i32
    %c0_i32_0 = arith.constant 0 : i32
    %c0_i32_1 = arith.constant 0 : i32
    return %arg0, %c0_i32, %c0_i32_0 : i32, i32, i32
  }
  func.func @transform_1(%arg0: i32) -> (i32, i32) {
    %c0_i32 = arith.constant 0 : i32
    %c0_i32_0 = arith.constant 0 : i32
    %c0_i32_1 = arith.constant 0 : i32
    return %c0_i32, %c0_i32_0 : i32, i32
  }
  func.func @transform_2(%arg0: i32) -> (i32, i32) {
    %c0_i32 = arith.constant 0 : i32
    %c0_i32_0 = arith.constant 0 : i32
    %c0_i32_1 = arith.constant 0 : i32
    return %c0_i32, %c0_i32_0 : i32, i32
  }
  func.func @transform_3(%arg0: i32) -> (i32, i32) {
    %c0_i32 = arith.constant 0 : i32
    %c0_i32_0 = arith.constant 0 : i32
    %c0_i32_1 = arith.constant 0 : i32
    return %c0_i32, %c0_i32_0 : i32, i32
  }
  func.func @transform_4(%arg0: i32) -> (i32, i32) {
    %c0_i32 = arith.constant 0 : i32
    %c0_i32_0 = arith.constant 0 : i32
    %c0_i32_1 = arith.constant 0 : i32
    return %c0_i32, %c0_i32_0 : i32, i32
  }
  func.func @transform_5(%arg0: i32) -> (i32, i32, i32) {
    %c0_i32 = arith.constant 0 : i32
    %c0_i32_0 = arith.constant 0 : i32
    %c0_i32_1 = arith.constant 0 : i32
    return %arg0, %c0_i32, %c0_i32_0 : i32, i32, i32
  }
  func.func @transform_6(%arg0: i32) -> (i32, i32, i32) {
    %c0_i32 = arith.constant 0 : i32
    %c0_i32_0 = arith.constant 0 : i32
    %c0_i32_1 = arith.constant 0 : i32
    return %arg0, %c0_i32, %c0_i32_0 : i32, i32, i32
  }
}

</mosaic_0001>

<llo_original>
// kernel: encoder_rnn_forward.1
$region0: #{encoder_rnn_forward.1}
  #allocation0 [shape = 'u32[]', space=smem, size = 0x4, offset = 0x4, fixed_abs, tag = 'smem constant byte address 0x4 - core index']
  #allocation1 [shape = 'u32[144,128]{1,0:T(1,128)}', space=vmem, size = 0x12000, scoped, tag = 'internal scratch']
  #allocation2 [shape = 'f32[64,384]{1,0:T(8,128)}', space=vmem, size = 0x18000, scoped, tag = 'scratch operand']
  %s0 = inlined_call_operand.vmem [shape: f32[1,64,128], index: 0, kind: input, shape index: {}]
  %s1 = inlined_call_operand.vmem [shape: f32[128,384], index: 1, kind: input, shape index: {}]
  %s2 = inlined_call_operand.vmem [shape: f32[1,384], index: 2, kind: input, shape index: {}]
  %s3 = inlined_call_operand.vmem [shape: f32[128,384], index: 3, kind: input, shape index: {}]
  %s4 = inlined_call_operand.vmem [shape: f32[1,384], index: 4, kind: input, shape index: {}]
  %s5 = inlined_call_operand.vmem [shape: f32[1,64,128], index: 5, kind: output, shape index: {0}]
  %s6 = inlined_call_operand.vmem [shape: f32[1,8,128], index: 6, kind: output, shape index: {1}]
  %7 = xla_tuple %s5, %s6
  %s8 = sld [smem:[#allocation0]]
  $region38: #{encoder_rnn_forward.1} parent=0
    _
  %s10 = ssub.s32 1, %s8
  %s11 = scalar_select 0, %s10, %s8
  // Predicated region
  $region2: #{encoder_rnn_forward.1} parent=0 // pred_check
    _
  $region3: #{encoder_rnn_forward.1} parent=0 // pred_check_branch
    %13 = sbr.rel (0) target = $region5
  $region4: #{encoder_rnn_forward.1} parent=0 // pred_region
    _
  $region5: #{encoder_rnn_forward.1} parent=0 // pred_fallthru
    _
  // Predicated region
  $region6: #{encoder_rnn_forward.1} parent=0 // pred_check
    _
  $region7: #{encoder_rnn_forward.1} parent=0 // pred_check_branch
    %15 = sbr.rel (0) target = $region9
  $region8: #{encoder_rnn_forward.1} parent=0 // pred_region
    _
  $region9: #{encoder_rnn_forward.1} parent=0 // pred_fallthru
    _
  // Predicated region
  $region10: #{encoder_rnn_forward.1} parent=0 // pred_check
    _
  $region11: #{encoder_rnn_forward.1} parent=0 // pred_check_branch
    %17 = sbr.rel (0) target = $region13
  $region12: #{encoder_rnn_forward.1} parent=0 // pred_region
    _
  $region13: #{encoder_rnn_forward.1} parent=0 // pred_fallthru
    _
  // Predicated region
  $region14: #{encoder_rnn_forward.1} parent=0 // pred_check
    _
  $region15: #{encoder_rnn_forward.1} parent=0 // pred_check_branch
    %19 = sbr.rel (0) target = $region17
  $region16: #{encoder_rnn_forward.1} parent=0 // pred_region
    _
  $region17: #{encoder_rnn_forward.1} parent=0 // pred_fallthru
    _
  // Predicated region
  $region18: #{encoder_rnn_forward.1} parent=0 // pred_check
    _
  $region19: #{encoder_rnn_forward.1} parent=0 // pred_check_branch
    %21 = sbr.rel (0) target = $region21
  $region20: #{encoder_rnn_forward.1} parent=0 // pred_region
    _
  $region21: #{encoder_rnn_forward.1} parent=0 // pred_fallthru
    _
  %v22 = vld [vmem:[%s0] sm:$0xff]
  %v23 = vld [vmem:[%s0 + $0x8] sm:$0xff]
  %v24 = vld [vmem:[%s0 + $0x10] sm:$0xff]
  %v25 = vld [vmem:[%s0 + $0x18] sm:$0xff]
  %v26 = vld [vmem:[%s0 + $0x20] sm:$0xff]
  %v27 = vld [vmem:[%s0 + $0x28] sm:$0xff]
  %v28 = vld [vmem:[%s0 + $0x30] sm:$0xff]
  %v29 = vld [vmem:[%s0 + $0x38] sm:$0xff]
  %v30 = vld [vmem:[%s1] sm:$0xff]
  %v31 = vld [vmem:[%s1 + $0x8] sm:$0xff]
  %v32 = vld [vmem:[%s1 + $0x10] sm:$0xff]
  %v33 = vld [vmem:[%s1 + $0x18] sm:$0xff]
  %v34 = vld [vmem:[%s1 + $0x20] sm:$0xff]
  %v35 = vld [vmem:[%s1 + $0x28] sm:$0xff]
  %v36 = vld [vmem:[%s1 + $0x30] sm:$0xff]
  %v37 = vld [vmem:[%s1 + $0x38] sm:$0xff]
  %v38 = vld [vmem:[%s1 + $0x40] sm:$0xff]
  %v39 = vld [vmem:[%s1 + $0x48] sm:$0xff]
  %v40 = vld [vmem:[%s1 + $0x50] sm:$0xff]
  %v41 = vld [vmem:[%s1 + $0x58] sm:$0xff]
  %v42 = vld [vmem:[%s1 + $0x60] sm:$0xff]
  %v43 = vld [vmem:[%s1 + $0x68] sm:$0xff]
  %v44 = vld [vmem:[%s1 + $0x70] sm:$0xff]
  %v45 = vld [vmem:[%s1 + $0x78] sm:$0xff]
  %v46 = vld [vmem:[%s1 + $0x80] sm:$0xff]
  %v47 = vld [vmem:[%s1 + $0x88] sm:$0xff]
  %v48 = vld [vmem:[%s1 + $0x90] sm:$0xff]
  %v49 = vld [vmem:[%s1 + $0x98] sm:$0xff]
  %v50 = vld [vmem:[%s1 + $0xa0] sm:$0xff]
  %v51 = vld [vmem:[%s1 + $0xa8] sm:$0xff]
  %v52 = vld [vmem:[%s1 + $0xb0] sm:$0xff]
  %v53 = vld [vmem:[%s1 + $0xb8] sm:$0xff]
  %v54 = vld [vmem:[%s1 + $0xc0] sm:$0xff]
  %v55 = vld [vmem:[%s1 + $0xc8] sm:$0xff]
  %v56 = vld [vmem:[%s1 + $0xd0] sm:$0xff]
  %v57 = vld [vmem:[%s1 + $0xd8] sm:$0xff]
  %v58 = vld [vmem:[%s1 + $0xe0] sm:$0xff]
  %v59 = vld [vmem:[%s1 + $0xe8] sm:$0xff]
  %v60 = vld [vmem:[%s1 + $0xf0] sm:$0xff]
  %v61 = vld [vmem:[%s1 + $0xf8] sm:$0xff]
  %v62 = vld [vmem:[%s1 + $0x100] sm:$0xff]
  %v63 = vld [vmem:[%s1 + $0x108] sm:$0xff]
  %v64 = vld [vmem:[%s1 + $0x110] sm:$0xff]
  %v65 = vld [vmem:[%s1 + $0x118] sm:$0xff]
  %v66 = vld [vmem:[%s1 + $0x120] sm:$0xff]
  %v67 = vld [vmem:[%s1 + $0x128] sm:$0xff]
  %v68 = vld [vmem:[%s1 + $0x130] sm:$0xff]
  %v69 = vld [vmem:[%s1 + $0x138] sm:$0xff]
  %v70 = vld [vmem:[%s1 + $0x140] sm:$0xff]
  %v71 = vld [vmem:[%s1 + $0x148] sm:$0xff]
  %v72 = vld [vmem:[%s1 + $0x150] sm:$0xff]
  %v73 = vld [vmem:[%s1 + $0x158] sm:$0xff]
  %v74 = vld [vmem:[%s1 + $0x160] sm:$0xff]
  %v75 = vld [vmem:[%s1 + $0x168] sm:$0xff]
  %v76 = vld [vmem:[%s1 + $0x170] sm:$0xff]
  %v77 = vld [vmem:[%s1 + $0x178] sm:$0xff]
  %v78 = vld [vmem:[%s2] sm:$0x7]
  %v80 = vlaneseq
  %v81 = vshrl.u32 %v80, 7
  %v82 = vsub.s32 0, %v81
  %v83 = vrot.slane %v78, %v82
  %v84 = vlaneseq
  %v85 = vshrl.u32 %v84, 7
  %v86 = vsub.s32 1, %v85
  %v87 = vrot.slane %v78, %v86
  %v88 = vlaneseq
  %v89 = vshrl.u32 %v88, 7
  %v90 = vsub.s32 2, %v89
  %v91 = vrot.slane %v78, %v90
  %95 = vmatprep.subr.mxu0 %v31
  %96 = vmatpush1.msra.mxu0 %v30
  %97 = vmatprep.subr.mxu0 %v34
  %98 = vmatpush1.msra.mxu0 %v33
  %99 = vmatprep.subr.mxu0 %v37
  %100 = vmatpush1.msra.mxu0 %v36
  %101 = vmatprep.subr.mxu0 %v40
  %102 = vmatpush1.msra.mxu0 %v39
  %103 = vmatprep.subr.mxu0 %v43
  %104 = vmatpush1.msra.mxu0 %v42
  %105 = vmatprep.subr.mxu0 %v46
  %106 = vmatpush1.msra.mxu0 %v45
  %107 = vmatprep.subr.mxu0 %v49
  %108 = vmatpush1.msra.mxu0 %v48
  %109 = vmatprep.subr.mxu0 %v52
  %110 = vmatpush1.msra.mxu0 %v51
  %111 = vmatprep.subr.mxu0 %v55
  %112 = vmatpush1.msra.mxu0 %v54
  %113 = vmatprep.subr.mxu0 %v58
  %114 = vmatpush1.msra.mxu0 %v57
  %115 = vmatprep.subr.mxu0 %v61
  %116 = vmatpush1.msra.mxu0 %v60
  %117 = vmatprep.subr.mxu0 %v64
  %118 = vmatpush1.msra.mxu0 %v63
  %119 = vmatprep.subr.mxu0 %v67
  %120 = vmatpush1.msra.mxu0 %v66
  %121 = vmatprep.subr.mxu0 %v70
  %122 = vmatpush1.msra.mxu0 %v69
  %123 = vmatprep.subr.mxu0 %v73
  %124 = vmatpush1.msra.mxu0 %v72
  %125 = vmatprep.subr.mxu0 %v76
  %126 = vmatpush1.msra.mxu0 %v75
  %127 = vmatprep.subr.mxu0 0.0
  %128 = vmatpush1.msra.mxu0 0.0
  %129 = vmatprep.subr.mxu0 0.0
  %130 = vmatpush1.msra.mxu0 0.0
  %131 = vmatprep.subr.mxu0 0.0
  %132 = vmatpush1.msra.mxu0 0.0
  %133 = vmatprep.subr.mxu0 0.0
  %134 = vmatpush1.msra.mxu0 0.0
  %135 = vmatprep.subr.mxu0 0.0
  %136 = vmatpush1.msra.mxu0 0.0
  %137 = vmatprep.subr.mxu0 0.0
  %138 = vmatpush1.msra.mxu0 0.0
  %139 = vmatprep.subr.mxu0 0.0
  %140 = vmatpush1.msra.mxu0 0.0
  %141 = vmatprep.subr.mxu0 0.0
  %142 = vmatpush1.msra.mxu0 0.0
  %143 = vmatprep.subr.mxu0 0.0
  %144 = vmatpush1.msra.mxu0 0.0
  %145 = vmatprep.subr.mxu0 0.0
  %146 = vmatpush1.msra.mxu0 0.0
  %147 = vmatprep.subr.mxu0 0.0
  %148 = vmatpush1.msra.mxu0 0.0
  %149 = vmatprep.subr.mxu0 0.0
  %150 = vmatpush1.msra.mxu0 0.0
  %151 = vmatprep.subr.mxu0 0.0
  %152 = vmatpush1.msra.mxu0 0.0
  %153 = vmatprep.subr.mxu0 0.0
  %154 = vmatpush1.msra.mxu0 0.0
  %155 = vmatprep.subr.mxu0 0.0
  %156 = vmatpush1.msra.mxu0 0.0
  %157 = vmatprep.subr.mxu0 0.0
  %158 = vmatpush1.msra.mxu0 0.0
  %159 = vmatprep.mubr.f32.mxu0 0.0
  %160 = vmatmul.mubr.f32.gmra.mrb[0].mxu0 %v22
  %v161 = vpop.f32.mrb[0].mxu0
  %v162 = vadd.f32 %v83, %v161
  %v163 = vpop.f32.mrb[0].mxu0
  %v164 = vadd.f32 %v87, %v163
  %165 = vmatprep.mubr.f32.mxu0 0.0
  %166 = vmatmul.mubr.f32.gmra.mrb[0].mxu0 %v23
  %v167 = vpop.f32.mrb[0].mxu0
  %v168 = vadd.f32 %v83, %v167
  %v169 = vpop.f32.mrb[0].mxu0
  %v170 = vadd.f32 %v87, %v169
  %171 = vmatprep.mubr.f32.mxu0 0.0
  %172 = vmatmul.mubr.f32.gmra.mrb[0].mxu0 %v24
  %v173 = vpop.f32.mrb[0].mxu0
  %v174 = vadd.f32 %v83, %v173
  %v175 = vpop.f32.mrb[0].mxu0
  %v176 = vadd.f32 %v87, %v175
  %177 = vmatprep.mubr.f32.mxu0 0.0
  %178 = vmatmul.mubr.f32.gmra.mrb[0].mxu0 %v25
  %v179 = vpop.f32.mrb[0].mxu0
  %v180 = vadd.f32 %v83, %v179
  %v181 = vpop.f32.mrb[0].mxu0
  %v182 = vadd.f32 %v87, %v181
  %183 = vmatprep.mubr.f32.mxu0 0.0
  %184 = vmatmul.mubr.f32.gmra.mrb[0].mxu0 %v26
  %v185 = vpop.f32.mrb[0].mxu0
  %v186 = vadd.f32 %v83, %v185
  %v187 = vpop.f32.mrb[0].mxu0
  %v188 = vadd.f32 %v87, %v187
  %189 = vmatprep.mubr.f32.mxu0 0.0
  %190 = vmatmul.mubr.f32.gmra.mrb[0].mxu0 %v27
  %v191 = vpop.f32.mrb[0].mxu0
  %v192 = vadd.f32 %v83, %v191
  %v193 = vpop.f32.mrb[0].mxu0
  %v194 = vadd.f32 %v87, %v193
  %195 = vmatprep.mubr.f32.mxu0 0.0
  %196 = vmatmul.mubr.f32.gmra.mrb[0].mxu0 %v28
  %v197 = vpop.f32.mrb[0].mxu0
  %v198 = vadd.f32 %v83, %v197
  %v199 = vpop.f32.mrb[0].mxu0
  %v200 = vadd.f32 %v87, %v199
  %201 = vmatprep.mubr.f32.mxu0 0.0
  %202 = vmatmul.mubr.f32.gmra.mrb[0].mxu0 %v29
  %v203 = vpop.f32.mrb[0].mxu0
  %v204 = vadd.f32 %v83, %v203
  %v205 = vpop.f32.mrb[0].mxu0
  %v206 = vadd.f32 %v87, %v205
  %207 = vdwg.mxu0
  %208 = vmatprep.subr.mxu0 0.0
  %209 = vmatpush1.msra.mxu0 %v32
  %210 = vmatprep.subr.mxu0 0.0
  %211 = vmatpush1.msra.mxu0 %v35
  %212 = vmatprep.subr.mxu0 0.0
  %213 = vmatpush1.msra.mxu0 %v38
  %214 = vmatprep.subr.mxu0 0.0
  %215 = vmatpush1.msra.mxu0 %v41
  %216 = vmatprep.subr.mxu0 0.0
  %217 = vmatpush1.msra.mxu0 %v44
  %218 = vmatprep.subr.mxu0 0.0
  %219 = vmatpush1.msra.mxu0 %v47
  %220 = vmatprep.subr.mxu0 0.0
  %221 = vmatpush1.msra.mxu0 %v50
  %222 = vmatprep.subr.mxu0 0.0
  %223 = vmatpush1.msra.mxu0 %v53
  %224 = vmatprep.subr.mxu0 0.0
  %225 = vmatpush1.msra.mxu0 %v56
  %226 = vmatprep.subr.mxu0 0.0
  %227 = vmatpush1.msra.mxu0 %v59
  %228 = vmatprep.subr.mxu0 0.0
  %229 = vmatpush1.msra.mxu0 %v62
  %230 = vmatprep.subr.mxu0 0.0
  %231 = vmatpush1.msra.mxu0 %v65
  %232 = vmatprep.subr.mxu0 0.0
  %233 = vmatpush1.msra.mxu0 %v68
  %234 = vmatprep.subr.mxu0 0.0
  %235 = vmatpush1.msra.mxu0 %v71
  %236 = vmatprep.subr.mxu0 0.0
  %237 = vmatpush1.msra.mxu0 %v74
  %238 = vmatprep.subr.mxu0 0.0
  %239 = vmatpush1.msra.mxu0 %v77
  %240 = vmatprep.subr.mxu0 0.0
  %241 = vmatpush1.msra.mxu0 0.0
  %242 = vmatprep.subr.mxu0 0.0
  %243 = vmatpush1.msra.mxu0 0.0
  %244 = vmatprep.subr.mxu0 0.0
  %245 = vmatpush1.msra.mxu0 0.0
  %246 = vmatprep.subr.mxu0 0.0
  %247 = vmatpush1.msra.mxu0 0.0
  %248 = vmatprep.subr.mxu0 0.0
  %249 = vmatpush1.msra.mxu0 0.0
  %250 = vmatprep.subr.mxu0 0.0
  %251 = vmatpush1.msra.mxu0 0.0
  %252 = vmatprep.subr.mxu0 0.0
  %253 = vmatpush1.msra.mxu0 0.0
  %254 = vmatprep.subr.mxu0 0.0
  %255 = vmatpush1.msra.mxu0 0.0
  %256 = vmatprep.subr.mxu0 0.0
  %257 = vmatpush1.msra.mxu0 0.0
  %258 = vmatprep.subr.mxu0 0.0
  %259 = vmatpush1.msra.mxu0 0.0
  %260 = vmatprep.subr.mxu0 0.0
  %261 = vmatpush1.msra.mxu0 0.0
  %262 = vmatprep.subr.mxu0 0.0
  %263 = vmatpush1.msra.mxu0 0.0
  %264 = vmatprep.subr.mxu0 0.0
  %265 = vmatpush1.msra.mxu0 0.0
  %266 = vmatprep.subr.mxu0 0.0
  %267 = vmatpush1.msra.mxu0 0.0
  %268 = vmatprep.subr.mxu0 0.0
  %269 = vmatpush1.msra.mxu0 0.0
  %270 = vmatprep.subr.mxu0 0.0
  %271 = vmatpush1.msra.mxu0 0.0
  %272 = vmatprep.mubr.f32.mxu0 0.0
  %273 = vmatmul.mubr.f32.gmra.mrb[0].mxu0 %v22
  %v274 = vpop.f32.mrb[0].mxu0
  %v275 = vadd.f32 %v91, %v274
  %v276 = vpop.f32.mrb[0].mxu0
  %277 = vmatprep.mubr.f32.mxu0 0.0
  %278 = vmatmul.mubr.f32.gmra.mrb[0].mxu0 %v23
  %v279 = vpop.f32.mrb[0].mxu0
  %v280 = vadd.f32 %v91, %v279
  %v281 = vpop.f32.mrb[0].mxu0
  %282 = vmatprep.mubr.f32.mxu0 0.0
  %283 = vmatmul.mubr.f32.gmra.mrb[0].mxu0 %v24
  %v284 = vpop.f32.mrb[0].mxu0
  %v285 = vadd.f32 %v91, %v284
  %v286 = vpop.f32.mrb[0].mxu0
  %287 = vmatprep.mubr.f32.mxu0 0.0
  %288 = vmatmul.mubr.f32.gmra.mrb[0].mxu0 %v25
  %v289 = vpop.f32.mrb[0].mxu0
  %v290 = vadd.f32 %v91, %v289
  %v291 = vpop.f32.mrb[0].mxu0
  %292 = vmatprep.mubr.f32.mxu0 0.0
  %293 = vmatmul.mubr.f32.gmra.mrb[0].mxu0 %v26
  %v294 = vpop.f32.mrb[0].mxu0
  %v295 = vadd.f32 %v91, %v294
  %v296 = vpop.f32.mrb[0].mxu0
  %297 = vmatprep.mubr.f32.mxu0 0.0
  %298 = vmatmul.mubr.f32.gmra.mrb[0].mxu0 %v27
  %v299 = vpop.f32.mrb[0].mxu0
  %v300 = vadd.f32 %v91, %v299
  %v301 = vpop.f32.mrb[0].mxu0
  %302 = vmatprep.mubr.f32.mxu0 0.0
  %303 = vmatmul.mubr.f32.gmra.mrb[0].mxu0 %v28
  %v304 = vpop.f32.mrb[0].mxu0
  %v305 = vadd.f32 %v91, %v304
  %v306 = vpop.f32.mrb[0].mxu0
  %307 = vmatprep.mubr.f32.mxu0 0.0
  %308 = vmatmul.mubr.f32.gmra.mrb[0].mxu0 %v29
  %v309 = vpop.f32.mrb[0].mxu0
  %v310 = vadd.f32 %v91, %v309
  %v311 = vpop.f32.mrb[0].mxu0
  %312 = vdwg.mxu0
  %313 = vst [vmem:[#allocation2] sm:$0xff] %v162
  %314 = vst [vmem:[#allocation2 + $0x8] sm:$0xff] %v164
  %315 = vst [vmem:[#allocation2 + $0x10] sm:$0xff] %v275
  %316 = vst [vmem:[#allocation2 + $0x18] sm:$0xff] %v168
  %317 = vst [vmem:[#allocation2 + $0x20] sm:$0xff] %v170
  %318 = vst [vmem:[#allocation2 + $0x28] sm:$0xff] %v280
  %319 = vst [vmem:[#allocation2 + $0x30] sm:$0xff] %v174
  %320 = vst [vmem:[#allocation2 + $0x38] sm:$0xff] %v176
  %321 = vst [vmem:[#allocation2 + $0x40] sm:$0xff] %v285
  %322 = vst [vmem:[#allocation2 + $0x48] sm:$0xff] %v180
  %323 = vst [vmem:[#allocation2 + $0x50] sm:$0xff] %v182
  %324 = vst [vmem:[#allocation2 + $0x58] sm:$0xff] %v290
  %325 = vst [vmem:[#allocation2 + $0x60] sm:$0xff] %v186
  %326 = vst [vmem:[#allocation2 + $0x68] sm:$0xff] %v188
  %327 = vst [vmem:[#allocation2 + $0x70] sm:$0xff] %v295
  %328 = vst [vmem:[#allocation2 + $0x78] sm:$0xff] %v192
  %329 = vst [vmem:[#allocation2 + $0x80] sm:$0xff] %v194
  %330 = vst [vmem:[#allocation2 + $0x88] sm:$0xff] %v300
  %331 = vst [vmem:[#allocation2 + $0x90] sm:$0xff] %v198
  %332 = vst [vmem:[#allocation2 + $0x98] sm:$0xff] %v200
  %333 = vst [vmem:[#allocation2 + $0xa0] sm:$0xff] %v305
  %334 = vst [vmem:[#allocation2 + $0xa8] sm:$0xff] %v204
  %335 = vst [vmem:[#allocation2 + $0xb0] sm:$0xff] %v206
  %336 = vst [vmem:[#allocation2 + $0xb8] sm:$0xff] %v310
  %v337 = vld [vmem:[%s3] sm:$0xff]
  %v338 = vld [vmem:[%s3 + $0x8] sm:$0xff]
  %v339 = vld [vmem:[%s3 + $0x10] sm:$0xff]
  %v340 = vld [vmem:[%s3 + $0x18] sm:$0xff]
  %v341 = vld [vmem:[%s3 + $0x20] sm:$0xff]
  %v342 = vld [vmem:[%s3 + $0x28] sm:$0xff]
  %v343 = vld [vmem:[%s3 + $0x30] sm:$0xff]
  %v344 = vld [vmem:[%s3 + $0x38] sm:$0xff]
  %v345 = vld [vmem:[%s3 + $0x40] sm:$0xff]
  %v346 = vld [vmem:[%s3 + $0x48] sm:$0xff]
  %v347 = vld [vmem:[%s3 + $0x50] sm:$0xff]
  %v348 = vld [vmem:[%s3 + $0x58] sm:$0xff]
  %v349 = vld [vmem:[%s3 + $0x60] sm:$0xff]
  %v350 = vld [vmem:[%s3 + $0x68] sm:$0xff]
  %v351 = vld [vmem:[%s3 + $0x70] sm:$0xff]
  %v352 = vld [vmem:[%s3 + $0x78] sm:$0xff]
  %v353 = vld [vmem:[%s3 + $0x80] sm:$0xff]
  %v354 = vld [vmem:[%s3 + $0x88] sm:$0xff]
  %v355 = vld [vmem:[%s3 + $0x90] sm:$0xff]
  %v356 = vld [vmem:[%s3 + $0x98] sm:$0xff]
  %v357 = vld [vmem:[%s3 + $0xa0] sm:$0xff]
  %v358 = vld [vmem:[%s3 + $0xa8] sm:$0xff]
  %v359 = vld [vmem:[%s3 + $0xb0] sm:$0xff]
  %v360 = vld [vmem:[%s3 + $0xb8] sm:$0xff]
  %v361 = vld [vmem:[%s3 + $0xc0] sm:$0xff]
  %v362 = vld [vmem:[%s3 + $0xc8] sm:$0xff]
  %v363 = vld [vmem:[%s3 + $0xd0] sm:$0xff]
  %v364 = vld [vmem:[%s3 + $0xd8] sm:$0xff]
  %v365 = vld [vmem:[%s3 + $0xe0] sm:$0xff]
  %v366 = vld [vmem:[%s3 + $0xe8] sm:$0xff]
  %v367 = vld [vmem:[%s3 + $0xf0] sm:$0xff]
  %v368 = vld [vmem:[%s3 + $0xf8] sm:$0xff]
  %v369 = vld [vmem:[%s3 + $0x100] sm:$0xff]
  %v370 = vld [vmem:[%s3 + $0x108] sm:$0xff]
  %v371 = vld [vmem:[%s3 + $0x110] sm:$0xff]
  %v372 = vld [vmem:[%s3 + $0x118] sm:$0xff]
  %v373 = vld [vmem:[%s3 + $0x120] sm:$0xff]
  %v374 = vld [vmem:[%s3 + $0x128] sm:$0xff]
  %v375 = vld [vmem:[%s3 + $0x130] sm:$0xff]
  %v376 = vld [vmem:[%s3 + $0x138] sm:$0xff]
  %v377 = vld [vmem:[%s3 + $0x140] sm:$0xff]
  %v378 = vld [vmem:[%s3 + $0x148] sm:$0xff]
  %v379 = vld [vmem:[%s3 + $0x150] sm:$0xff]
  %v380 = vld [vmem:[%s3 + $0x158] sm:$0xff]
  %v381 = vld [vmem:[%s3 + $0x160] sm:$0xff]
  %v382 = vld [vmem:[%s3 + $0x168] sm:$0xff]
  %v383 = vld [vmem:[%s3 + $0x170] sm:$0xff]
  %v384 = vld [vmem:[%s3 + $0x178] sm:$0xff]
  %v385 = vld [vmem:[%s4] sm:$0x7]
  %v386 = vld [vmem:[#allocation2] sm:$0xff]
  %v387 = vld [vmem:[#allocation2 + $0x8] sm:$0xff]
  %v388 = vld [vmem:[#allocation2 + $0x10] sm:$0xff]
  %v390 = vlaneseq
  %v391 = vshrl.u32 %v390, 7
  %v392 = vsub.s32 0, %v391
  %v393 = vrot.slane %v385, %v392
  %v394 = vlaneseq
  %v395 = vshrl.u32 %v394, 7
  %v396 = vsub.s32 1, %v395
  %v397 = vrot.slane %v385, %v396
  %v398 = vlaneseq
  %v399 = vshrl.u32 %v398, 7
  %v400 = vsub.s32 2, %v399
  %v401 = vrot.slane %v385, %v400
  %405 = vmatprep.subr.mxu0 %v338
  %406 = vmatpush1.msra.mxu0 %v337
  %407 = vmatprep.subr.mxu0 %v341
  %408 = vmatpush1.msra.mxu0 %v340
  %409 = vmatprep.subr.mxu0 %v344
  %410 = vmatpush1.msra.mxu0 %v343
  %411 = vmatprep.subr.mxu0 %v347
  %412 = vmatpush1.msra.mxu0 %v346
  %413 = vmatprep.subr.mxu0 %v350
  %414 = vmatpush1.msra.mxu0 %v349
  %415 = vmatprep.subr.mxu0 %v353
  %416 = vmatpush1.msra.mxu0 %v352
  %417 = vmatprep.subr.mxu0 %v356
  %418 = vmatpush1.msra.mxu0 %v355
  %419 = vmatprep.subr.mxu0 %v359
  %420 = vmatpush1.msra.mxu0 %v358
  %421 = vmatprep.subr.mxu0 %v362
  %422 = vmatpush1.msra.mxu0 %v361
  %423 = vmatprep.subr.mxu0 %v365
  %424 = vmatpush1.msra.mxu0 %v364
  %425 = vmatprep.subr.mxu0 %v368
  %426 = vmatpush1.msra.mxu0 %v367
  %427 = vmatprep.subr.mxu0 %v371
  %428 = vmatpush1.msra.mxu0 %v370
  %429 = vmatprep.subr.mxu0 %v374
  %430 = vmatpush1.msra.mxu0 %v373
  %431 = vmatprep.subr.mxu0 %v377
  %432 = vmatpush1.msra.mxu0 %v376
  %433 = vmatprep.subr.mxu0 %v380
  %434 = vmatpush1.msra.mxu0 %v379
  %435 = vmatprep.subr.mxu0 %v383
  %436 = vmatpush1.msra.mxu0 %v382
  %437 = vmatprep.subr.mxu0 0.0
  %438 = vmatpush1.msra.mxu0 0.0
  %439 = vmatprep.subr.mxu0 0.0
  %440 = vmatpush1.msra.mxu0 0.0
  %441 = vmatprep.subr.mxu0 0.0
  %442 = vmatpush1.msra.mxu0 0.0
  %443 = vmatprep.subr.mxu0 0.0
  %444 = vmatpush1.msra.mxu0 0.0
  %445 = vmatprep.subr.mxu0 0.0
  %446 = vmatpush1.msra.mxu0 0.0
  %447 = vmatprep.subr.mxu0 0.0
  %448 = vmatpush1.msra.mxu0 0.0
  %449 = vmatprep.subr.mxu0 0.0
  %450 = vmatpush1.msra.mxu0 0.0
  %451 = vmatprep.subr.mxu0 0.0
  %452 = vmatpush1.msra.mxu0 0.0
  %453 = vmatprep.subr.mxu0 0.0
  %454 = vmatpush1.msra.mxu0 0.0
  %455 = vmatprep.subr.mxu0 0.0
  %456 = vmatpush1.msra.mxu0 0.0
  %457 = vmatprep.subr.mxu0 0.0
  %458 = vmatpush1.msra.mxu0 0.0
  %459 = vmatprep.subr.mxu0 0.0
  %460 = vmatpush1.msra.mxu0 0.0
  %461 = vmatprep.subr.mxu0 0.0
  %462 = vmatpush1.msra.mxu0 0.0
  %463 = vmatprep.subr.mxu0 0.0
  %464 = vmatpush1.msra.mxu0 0.0
  %465 = vmatprep.subr.mxu0 0.0
  %466 = vmatpush1.msra.mxu0 0.0
  %467 = vmatprep.subr.mxu0 0.0
  %468 = vmatpush1.msra.mxu0 0.0
  %469 = vmatprep.mubr.f32.mxu0 0.0
  %470 = vmatmul.mubr.f32.gmra.mrb[0].mxu0 0.0
  %v471 = vpop.f32.mrb[0].mxu0
  %v472 = vadd.f32 %v393, %v471
  %v473 = vpop.f32.mrb[0].mxu0
  %v474 = vadd.f32 %v397, %v473
  %475 = vdwg.mxu0
  %476 = vmatprep.subr.mxu0 0.0
  %477 = vmatpush1.msra.mxu0 %v339
  %478 = vmatprep.subr.mxu0 0.0
  %479 = vmatpush1.msra.mxu0 %v342
  %480 = vmatprep.subr.mxu0 0.0
  %481 = vmatpush1.msra.mxu0 %v345
  %482 = vmatprep.subr.mxu0 0.0
  %483 = vmatpush1.msra.mxu0 %v348
  %484 = vmatprep.subr.mxu0 0.0
  %485 = vmatpush1.msra.mxu0 %v351
  %486 = vmatprep.subr.mxu0 0.0
  %487 = vmatpush1.msra.mxu0 %v354
  %488 = vmatprep.subr.mxu0 0.0
  %489 = vmatpush1.msra.mxu0 %v357
  %490 = vmatprep.subr.mxu0 0.0
  %491 = vmatpush1.msra.mxu0 %v360
  %492 = vmatprep.subr.mxu0 0.0
  %493 = vmatpush1.msra.mxu0 %v363
  %494 = vmatprep.subr.mxu0 0.0
  %495 = vmatpush1.msra.mxu0 %v366
  %496 = vmatprep.subr.mxu0 0.0
  %497 = vmatpush1.msra.mxu0 %v369
  %498 = vmatprep.subr.mxu0 0.0
  %499 = vmatpush1.msra.mxu0 %v372
  %500 = vmatprep.subr.mxu0 0.0
  %501 = vmatpush1.msra.mxu0 %v375
  %502 = vmatprep.subr.mxu0 0.0
  %503 = vmatpush1.msra.mxu0 %v378
  %504 = vmatprep.subr.mxu0 0.0
  %505 = vmatpush1.msra.mxu0 %v381
  %506 = vmatprep.subr.mxu0 0.0
  %507 = vmatpush1.msra.mxu0 %v384
  %508 = vmatprep.subr.mxu0 0.0
  %509 = vmatpush1.msra.mxu0 0.0
  %510 = vmatprep.subr.mxu0 0.0
  %511 = vmatpush1.msra.mxu0 0.0
  %512 = vmatprep.subr.mxu0 0.0
  %513 = vmatpush1.msra.mxu0 0.0
  %514 = vmatprep.subr.mxu0 0.0
  %515 = vmatpush1.msra.mxu0 0.0
  %516 = vmatprep.subr.mxu0 0.0
  %517 = vmatpush1.msra.mxu0 0.0
  %518 = vmatprep.subr.mxu0 0.0
  %519 = vmatpush1.msra.mxu0 0.0
  %520 = vmatprep.subr.mxu0 0.0
  %521 = vmatpush1.msra.mxu0 0.0
  %522 = vmatprep.subr.mxu0 0.0
  %523 = vmatpush1.msra.mxu0 0.0
  %524 = vmatprep.subr.mxu0 0.0
  %525 = vmatpush1.msra.mxu0 0.0
  %526 = vmatprep.subr.mxu0 0.0
  %527 = vmatpush1.msra.mxu0 0.0
  %528 = vmatprep.subr.mxu0 0.0
  %529 = vmatpush1.msra.mxu0 0.0
  %530 = vmatprep.subr.mxu0 0.0
  %531 = vmatpush1.msra.mxu0 0.0
  %532 = vmatprep.subr.mxu0 0.0
  %533 = vmatpush1.msra.mxu0 0.0
  %534 = vmatprep.subr.mxu0 0.0
  %535 = vmatpush1.msra.mxu0 0.0
  %536 = vmatprep.subr.mxu0 0.0
  %537 = vmatpush1.msra.mxu0 0.0
  %538 = vmatprep.subr.mxu0 0.0
  %539 = vmatpush1.msra.mxu0 0.0
  %540 = vmatprep.mubr.f32.mxu0 0.0
  %541 = vmatmul.mubr.f32.gmra.mrb[0].mxu0 0.0
  %v542 = vpop.f32.mrb[0].mxu0
  %v543 = vadd.f32 %v401, %v542
  %v544 = vpop.f32.mrb[0].mxu0
  %545 = vdwg.mxu0
  %v546 = vadd.f32 %v386, %v472
  %v547 = vsub.f32 0.0, %v546
  %v548 = vmul.f32 %v547, 1.442695
  %v549 = vpow.pop %v548
  %v550 = vadd.f32 %v549, 1.0
  %v551 = vrcp.pop %v550
  %v552 = vmul.f32 1.0, %v551
  %v553 = vadd.f32 %v387, %v474
  %v554 = vsub.f32 0.0, %v553
  %v555 = vmul.f32 %v554, 1.442695
  %v556 = vpow.pop %v555
  %v557 = vadd.f32 %v556, 1.0
  %v558 = vrcp.pop %v557
  %v559 = vmul.f32 1.0, %v558
  %v560 = vmul.f32 %v552, %v543
  %v561 = vadd.f32 %v388, %v560
  %v562 = vtanh.pop %v561
  %v563 = vsub.f32 1.0, %v559
  %v564 = vmul.f32 %v563, %v562
  %v565 = vmul.f32 %v559, 0.0
  %v566 = vadd.f32 %v564, %v565
  %567 = vst [vmem:[%s5] sm:$0xff] %v566
  %v568 = vld [vmem:[#allocation2 + $0x18] sm:$0xff]
  %v569 = vld [vmem:[#allocation2 + $0x20] sm:$0xff]
  %v570 = vld [vmem:[#allocation2 + $0x28] sm:$0xff]
  %571 = vmatprep.subr.mxu0 %v338
  %572 = vmatpush1.msra.mxu0 %v337
  %573 = vmatprep.subr.mxu0 %v341
  %574 = vmatpush1.msra.mxu0 %v340
  %575 = vmatprep.subr.mxu0 %v344
  %576 = vmatpush1.msra.mxu0 %v343
  %577 = vmatprep.subr.mxu0 %v347
  %578 = vmatpush1.msra.mxu0 %v346
  %579 = vmatprep.subr.mxu0 %v350
  %580 = vmatpush1.msra.mxu0 %v349
  %581 = vmatprep.subr.mxu0 %v353
  %582 = vmatpush1.msra.mxu0 %v352
  %583 = vmatprep.subr.mxu0 %v356
  %584 = vmatpush1.msra.mxu0 %v355
  %585 = vmatprep.subr.mxu0 %v359
  %586 = vmatpush1.msra.mxu0 %v358
  %587 = vmatprep.subr.mxu0 %v362
  %588 = vmatpush1.msra.mxu0 %v361
  %589 = vmatprep.subr.mxu0 %v365
  %590 = vmatpush1.msra.mxu0 %v364
  %591 = vmatprep.subr.mxu0 %v368
  %592 = vmatpush1.msra.mxu0 %v367
  %593 = vmatprep.subr.mxu0 %v371
  %594 = vmatpush1.msra.mxu0 %v370
  %595 = vmatprep.subr.mxu0 %v374
  %596 = vmatpush1.msra.mxu0 %v373
  %597 = vmatprep.subr.mxu0 %v377
  %598 = vmatpush1.msra.mxu0 %v376
  %599 = vmatprep.subr.mxu0 %v380
  %600 = vmatpush1.msra.mxu0 %v379
  %601 = vmatprep.subr.mxu0 %v383
  %602 = vmatpush1.msra.mxu0 %v382
  %603 = vmatprep.subr.mxu0 0.0
  %604 = vmatpush1.msra.mxu0 0.0
  %605 = vmatprep.subr.mxu0 0.0
  %606 = vmatpush1.msra.mxu0 0.0
  %607 = vmatprep.subr.mxu0 0.0
  %608 = vmatpush1.msra.mxu0 0.0
  %609 = vmatprep.subr.mxu0 0.0
  %610 = vmatpush1.msra.mxu0 0.0
  %611 = vmatprep.subr.mxu0 0.0
  %612 = vmatpush1.msra.mxu0 0.0
  %613 = vmatprep.subr.mxu0 0.0
  %614 = vmatpush1.msra.mxu0 0.0
  %615 = vmatprep.subr.mxu0 0.0
  %616 = vmatpush1.msra.mxu0 0.0
  %617 = vmatprep.subr.mxu0 0.0
  %618 = vmatpush1.msra.mxu0 0.0
  %619 = vmatprep.subr.mxu0 0.0
  %620 = vmatpush1.msra.mxu0 0.0
  %621 = vmatprep.subr.mxu0 0.0
  %622 = vmatpush1.msra.mxu0 0.0
  %623 = vmatprep.subr.mxu0 0.0
  %624 = vmatpush1.msra.mxu0 0.0
  %625 = vmatprep.subr.mxu0 0.0
  %626 = vmatpush1.msra.mxu0 0.0
  %627 = vmatprep.subr.mxu0 0.0
  %628 = vmatpush1.msra.mxu0 0.0
  %629 = vmatprep.subr.mxu0 0.0
  %630 = vmatpush1.msra.mxu0 0.0
  %631 = vmatprep.subr.mxu0 0.0
  %632 = vmatpush1.msra.mxu0 0.0
  %633 = vmatprep.subr.mxu0 0.0
  %634 = vmatpush1.msra.mxu0 0.0
  %635 = vmatprep.mubr.f32.mxu0 0.0
  %636 = vmatmul.mubr.f32.gmra.mrb[0].mxu0 %v566
  %v637 = vpop.f32.mrb[0].mxu0
  %v638 = vadd.f32 %v393, %v637
  %v639 = vpop.f32.mrb[0].mxu0
  %v640 = vadd.f32 %v397, %v639
  %641 = vdwg.mxu0
  %642 = vmatprep.subr.mxu0 0.0
  %643 = vmatpush1.msra.mxu0 %v339
  %644 = vmatprep.subr.mxu0 0.0
  %645 = vmatpush1.msra.mxu0 %v342
  %646 = vmatprep.subr.mxu0 0.0
  %647 = vmatpush1.msra.mxu0 %v345
  %648 = vmatprep.subr.mxu0 0.0
  %649 = vmatpush1.msra.mxu0 %v348
  %650 = vmatprep.subr.mxu0 0.0
  %651 = vmatpush1.msra.mxu0 %v351
  %652 = vmatprep.subr.mxu0 0.0
  %653 = vmatpush1.msra.mxu0 %v354
  %654 = vmatprep.subr.mxu0 0.0
  %655 = vmatpush1.msra.mxu0 %v357
  %656 = vmatprep.subr.mxu0 0.0
  %657 = vmatpush1.msra.mxu0 %v360
  %658 = vmatprep.subr.mxu0 0.0
  %659 = vmatpush1.msra.mxu0 %v363
  %660 = vmatprep.subr.mxu0 0.0
  %661 = vmatpush1.msra.mxu0 %v366
  %662 = vmatprep.subr.mxu0 0.0
  %663 = vmatpush1.msra.mxu0 %v369
  %664 = vmatprep.subr.mxu0 0.0
  %665 = vmatpush1.msra.mxu0 %v372
  %666 = vmatprep.subr.mxu0 0.0
  %667 = vmatpush1.msra.mxu0 %v375
  %668 = vmatprep.subr.mxu0 0.0
  %669 = vmatpush1.msra.mxu0 %v378
  %670 = vmatprep.subr.mxu0 0.0
  %671 = vmatpush1.msra.mxu0 %v381
  %672 = vmatprep.subr.mxu0 0.0
  %673 = vmatpush1.msra.mxu0 %v384
  %674 = vmatprep.subr.mxu0 0.0
  %675 = vmatpush1.msra.mxu0 0.0
  %676 = vmatprep.subr.mxu0 0.0
  %677 = vmatpush1.msra.mxu0 0.0
  %678 = vmatprep.subr.mxu0 0.0
  %679 = vmatpush1.msra.mxu0 0.0
  %680 = vmatprep.subr.mxu0 0.0
  %681 = vmatpush1.msra.mxu0 0.0
  %682 = vmatprep.subr.mxu0 0.0
  %683 = vmatpush1.msra.mxu0 0.0
  %684 = vmatprep.subr.mxu0 0.0
  %685 = vmatpush1.msra.mxu0 0.0
  %686 = vmatprep.subr.mxu0 0.0
  %687 = vmatpush1.msra.mxu0 0.0
  %688 = vmatprep.subr.mxu0 0.0
  %689 = vmatpush1.msra.mxu0 0.0
  %690 = vmatprep.subr.mxu0 0.0
  %691 = vmatpush1.msra.mxu0 0.0
  %692 = vmatprep.subr.mxu0 0.0
  %693 = vmatpush1.msra.mxu0 0.0
  %694 = vmatprep.subr.mxu0 0.0
  %695 = vmatpush1.msra.mxu0 0.0
  %696 = vmatprep.subr.mxu0 0.0
  %697 = vmatpush1.msra.mxu0 0.0
  %698 = vmatprep.subr.mxu0 0.0
  %699 = vmatpush1.msra.mxu0 0.0
  %700 = vmatprep.subr.mxu0 0.0
  %701 = vmatpush1.msra.mxu0 0.0
  %702 = vmatprep.subr.mxu0 0.0
  %703 = vmatpush1.msra.mxu0 0.0
  %704 = vmatprep.subr.mxu0 0.0
  %705 = vmatpush1.msra.mxu0 0.0
  %706 = vmatprep.mubr.f32.mxu0 0.0
  %707 = vmatmul.mubr.f32.gmra.mrb[0].mxu0 %v566
  %v708 = vpop.f32.mrb[0].mxu0
  %v709 = vadd.f32 %v401, %v708
  %v710 = vpop.f32.mrb[0].mxu0
  %711 = vdwg.mxu0
  %v712 = vadd.f32 %v568, %v638
  %v713 = vsub.f32 0.0, %v712
  %v714 = vmul.f32 %v713, 1.442695
  %v715 = vpow.pop %v714
  %v716 = vadd.f32 %v715, 1.0
  %v717 = vrcp.pop %v716
  %v718 = vmul.f32 1.0, %v717
  %v719 = vadd.f32 %v569, %v640
  %v720 = vsub.f32 0.0, %v719
  %v721 = vmul.f32 %v720, 1.442695
  %v722 = vpow.pop %v721
  %v723 = vadd.f32 %v722, 1.0
  %v724 = vrcp.pop %v723
  %v725 = vmul.f32 1.0, %v724
  %v726 = vmul.f32 %v718, %v709
  %v727 = vadd.f32 %v570, %v726
  %v728 = vtanh.pop %v727
  %v729 = vsub.f32 1.0, %v725
  %v730 = vmul.f32 %v729, %v728
  %v731 = vmul.f32 %v725, %v566
  %v732 = vadd.f32 %v730, %v731
  %733 = vst [vmem:[%s5 + $0x8] sm:$0xff] %v732
  %v734 = vld [vmem:[#allocation2 + $0x30] sm:$0xff]
  %v735 = vld [vmem:[#allocation2 + $0x38] sm:$0xff]
  %v736 = vld [vmem:[#allocation2 + $0x40] sm:$0xff]
  %737 = vmatprep.subr.mxu0 %v338
  %738 = vmatpush1.msra.mxu0 %v337
  %739 = vmatprep.subr.mxu0 %v341
  %740 = vmatpush1.msra.mxu0 %v340
  %741 = vmatprep.subr.mxu0 %v344
  %742 = vmatpush1.msra.mxu0 %v343
  %743 = vmatprep.subr.mxu0 %v347
  %744 = vmatpush1.msra.mxu0 %v346
  %745 = vmatprep.subr.mxu0 %v350
  %746 = vmatpush1.msra.mxu0 %v349
  %747 = vmatprep.subr.mxu0 %v353
  %748 = vmatpush1.msra.mxu0 %v352
  %749 = vmatprep.subr.mxu0 %v356
  %750 = vmatpush1.msra.mxu0 %v355
  %751 = vmatprep.subr.mxu0 %v359
  %752 = vmatpush1.msra.mxu0 %v358
  %753 = vmatprep.subr.mxu0 %v362
  %754 = vmatpush1.msra.mxu0 %v361
  %755 = vmatprep.subr.mxu0 %v365
  %756 = vmatpush1.msra.mxu0 %v364
  %757 = vmatprep.subr.mxu0 %v368
  %758 = vmatpush1.msra.mxu0 %v367
  %759 = vmatprep.subr.mxu0 %v371
  %760 = vmatpush1.msra.mxu0 %v370
  %761 = vmatprep.subr.mxu0 %v374
  %762 = vmatpush1.msra.mxu0 %v373
  %763 = vmatprep.subr.mxu0 %v377
  %764 = vmatpush1.msra.mxu0 %v376
  %765 = vmatprep.subr.mxu0 %v380
  %766 = vmatpush1.msra.mxu0 %v379
  %767 = vmatprep.subr.mxu0 %v383
  %768 = vmatpush1.msra.mxu0 %v382
  %769 = vmatprep.subr.mxu0 0.0
  %770 = vmatpush1.msra.mxu0 0.0
  %771 = vmatprep.subr.mxu0 0.0
  %772 = vmatpush1.msra.mxu0 0.0
  %773 = vmatprep.subr.mxu0 0.0
  %774 = vmatpush1.msra.mxu0 0.0
  %775 = vmatprep.subr.mxu0 0.0
  %776 = vmatpush1.msra.mxu0 0.0
  %777 = vmatprep.subr.mxu0 0.0
  %778 = vmatpush1.msra.mxu0 0.0
  %779 = vmatprep.subr.mxu0 0.0
  %780 = vmatpush1.msra.mxu0 0.0
  %781 = vmatprep.subr.mxu0 0.0
  %782 = vmatpush1.msra.mxu0 0.0
  %783 = vmatprep.subr.mxu0 0.0
  %784 = vmatpush1.msra.mxu0 0.0
  %785 = vmatprep.subr.mxu0 0.0
  %786 = vmatpush1.msra.mxu0 0.0
  %787 = vmatprep.subr.mxu0 0.0
  %788 = vmatpush1.msra.mxu0 0.0
  %789 = vmatprep.subr.mxu0 0.0
  %790 = vmatpush1.msra.mxu0 0.0
  %791 = vmatprep.subr.mxu0 0.0
  %792 = vmatpush1.msra.mxu0 0.0
  %793 = vmatprep.subr.mxu0 0.0
  %794 = vmatpush1.msra.mxu0 0.0
  %795 = vmatprep.subr.mxu0 0.0
  %796 = vmatpush1.msra.mxu0 0.0
  %797 = vmatprep.subr.mxu0 0.0
  %798 = vmatpush1.msra.mxu0 0.0
  %799 = vmatprep.subr.mxu0 0.0
  %800 = vmatpush1.msra.mxu0 0.0
  %801 = vmatprep.mubr.f32.mxu0 0.0
  %802 = vmatmul.mubr.f32.gmra.mrb[0].mxu0 %v732
  %v803 = vpop.f32.mrb[0].mxu0
  %v804 = vadd.f32 %v393, %v803
  %v805 = vpop.f32.mrb[0].mxu0
  %v806 = vadd.f32 %v397, %v805
  %807 = vdwg.mxu0
  %808 = vmatprep.subr.mxu0 0.0
  %809 = vmatpush1.msra.mxu0 %v339
  %810 = vmatprep.subr.mxu0 0.0
  %811 = vmatpush1.msra.mxu0 %v342
  %812 = vmatprep.subr.mxu0 0.0
  %813 = vmatpush1.msra.mxu0 %v345
  %814 = vmatprep.subr.mxu0 0.0
  %815 = vmatpush1.msra.mxu0 %v348
  %816 = vmatprep.subr.mxu0 0.0
  %817 = vmatpush1.msra.mxu0 %v351
  %818 = vmatprep.subr.mxu0 0.0
  %819 = vmatpush1.msra.mxu0 %v354
  %820 = vmatprep.subr.mxu0 0.0
  %821 = vmatpush1.msra.mxu0 %v357
  %822 = vmatprep.subr.mxu0 0.0
  %823 = vmatpush1.msra.mxu0 %v360
  %824 = vmatprep.subr.mxu0 0.0
  %825 = vmatpush1.msra.mxu0 %v363
  %826 = vmatprep.subr.mxu0 0.0
  %827 = vmatpush1.msra.mxu0 %v366
  %828 = vmatprep.subr.mxu0 0.0
  %829 = vmatpush1.msra.mxu0 %v369
  %830 = vmatprep.subr.mxu0 0.0
  %831 = vmatpush1.msra.mxu0 %v372
  %832 = vmatprep.subr.mxu0 0.0
  %833 = vmatpush1.msra.mxu0 %v375
  %834 = vmatprep.subr.mxu0 0.0
  %835 = vmatpush1.msra.mxu0 %v378
  %836 = vmatprep.subr.mxu0 0.0
  %837 = vmatpush1.msra.mxu0 %v381
  %838 = vmatprep.subr.mxu0 0.0
  %839 = vmatpush1.msra.mxu0 %v384
  %840 = vmatprep.subr.mxu0 0.0
  %841 = vmatpush1.msra.mxu0 0.0
  %842 = vmatprep.subr.mxu0 0.0
  %843 = vmatpush1.msra.mxu0 0.0
  %844 = vmatprep.subr.mxu0 0.0
  %845 = vmatpush1.msra.mxu0 0.0
  %846 = vmatprep.subr.mxu0 0.0
  %847 = vmatpush1.msra.mxu0 0.0
  %848 = vmatprep.subr.mxu0 0.0
  %849 = vmatpush1.msra.mxu0 0.0
  %850 = vmatprep.subr.mxu0 0.0
  %851 = vmatpush1.msra.mxu0 0.0
  %852 = vmatprep.subr.mxu0 0.0
  %853 = vmatpush1.msra.mxu0 0.0
  %854 = vmatprep.subr.mxu0 0.0
  %855 = vmatpush1.msra.mxu0 0.0
  %856 = vmatprep.subr.mxu0 0.0
  %857 = vmatpush1.msra.mxu0 0.0
  %858 = vmatprep.subr.mxu0 0.0
  %859 = vmatpush1.msra.mxu0 0.0
  %860 = vmatprep.subr.mxu0 0.0
  %861 = vmatpush1.msra.mxu0 0.0
  %862 = vmatprep.subr.mxu0 0.0
  %863 = vmatpush1.msra.mxu0 0.0
  %864 = vmatprep.subr.mxu0 0.0
  %865 = vmatpush1.msra.mxu0 0.0
  %866 = vmatprep.subr.mxu0 0.0
  %867 = vmatpush1.msra.mxu0 0.0
  %868 = vmatprep.subr.mxu0 0.0
  %869 = vmatpush1.msra.mxu0 0.0
  %870 = vmatprep.subr.mxu0 0.0
  %871 = vmatpush1.msra.mxu0 0.0
  %872 = vmatprep.mubr.f32.mxu0 0.0
  %873 = vmatmul.mubr.f32.gmra.mrb[0].mxu0 %v732
  %v874 = vpop.f32.mrb[0].mxu0
  %v875 = vadd.f32 %v401, %v874
  %v876 = vpop.f32.mrb[0].mxu0
  %877 = vdwg.mxu0
  %v878 = vadd.f32 %v734, %v804
  %v879 = vsub.f32 0.0, %v878
  %v880 = vmul.f32 %v879, 1.442695
  %v881 = vpow.pop %v880
  %v882 = vadd.f32 %v881, 1.0
  %v883 = vrcp.pop %v882
  %v884 = vmul.f32 1.0, %v883
  %v885 = vadd.f32 %v735, %v806
  %v886 = vsub.f32 0.0, %v885
  %v887 = vmul.f32 %v886, 1.442695
  %v888 = vpow.pop %v887
  %v889 = vadd.f32 %v888, 1.0
  %v890 = vrcp.pop %v889
  %v891 = vmul.f32 1.0, %v890
  %v892 = vmul.f32 %v884, %v875
  %v893 = vadd.f32 %v736, %v892
  %v894 = vtanh.pop %v893
  %v895 = vsub.f32 1.0, %v891
  %v896 = vmul.f32 %v895, %v894
  %v897 = vmul.f32 %v891, %v732
  %v898 = vadd.f32 %v896, %v897
  %899 = vst [vmem:[%s5 + $0x10] sm:$0xff] %v898
  %v900 = vld [vmem:[#allocation2 + $0x48] sm:$0xff]
  %v901 = vld [vmem:[#allocation2 + $0x50] sm:$0xff]
  %v902 = vld [vmem:[#allocation2 + $0x58] sm:$0xff]
  %903 = vmatprep.subr.mxu0 %v338
  %904 = vmatpush1.msra.mxu0 %v337
  %905 = vmatprep.subr.mxu0 %v341
  %906 = vmatpush1.msra.mxu0 %v340
  %907 = vmatprep.subr.mxu0 %v344
  %908 = vmatpush1.msra.mxu0 %v343
  %909 = vmatprep.subr.mxu0 %v347
  %910 = vmatpush1.msra.mxu0 %v346
  %911 = vmatprep.subr.mxu0 %v350
  %912 = vmatpush1.msra.mxu0 %v349
  %913 = vmatprep.subr.mxu0 %v353
  %914 = vmatpush1.msra.mxu0 %v352
  %915 = vmatprep.subr.mxu0 %v356
  %916 = vmatpush1.msra.mxu0 %v355
  %917 = vmatprep.subr.mxu0 %v359
  %918 = vmatpush1.msra.mxu0 %v358
  %919 = vmatprep.subr.mxu0 %v362
  %920 = vmatpush1.msra.mxu0 %v361
  %921 = vmatprep.subr.mxu0 %v365
  %922 = vmatpush1.msra.mxu0 %v364
  %923 = vmatprep.subr.mxu0 %v368
  %924 = vmatpush1.msra.mxu0 %v367
  %925 = vmatprep.subr.mxu0 %v371
  %926 = vmatpush1.msra.mxu0 %v370
  %927 = vmatprep.subr.mxu0 %v374
  %928 = vmatpush1.msra.mxu0 %v373
  %929 = vmatprep.subr.mxu0 %v377
  %930 = vmatpush1.msra.mxu0 %v376
  %931 = vmatprep.subr.mxu0 %v380
  %932 = vmatpush1.msra.mxu0 %v379
  %933 = vmatprep.subr.mxu0 %v383
  %934 = vmatpush1.msra.mxu0 %v382
  %935 = vmatprep.subr.mxu0 0.0
  %936 = vmatpush1.msra.mxu0 0.0
  %937 = vmatprep.subr.mxu0 0.0
  %938 = vmatpush1.msra.mxu0 0.0
  %939 = vmatprep.subr.mxu0 0.0
  %940 = vmatpush1.msra.mxu0 0.0
  %941 = vmatprep.subr.mxu0 0.0
  %942 = vmatpush1.msra.mxu0 0.0
  %943 = vmatprep.subr.mxu0 0.0
  %944 = vmatpush1.msra.mxu0 0.0
  %945 = vmatprep.subr.mxu0 0.0
  %946 = vmatpush1.msra.mxu0 0.0
  %947 = vmatprep.subr.mxu0 0.0
  %948 = vmatpush1.msra.mxu0 0.0
  %949 = vmatprep.subr.mxu0 0.0
  %950 = vmatpush1.msra.mxu0 0.0
  %951 = vmatprep.subr.mxu0 0.0
  %952 = vmatpush1.msra.mxu0 0.0
  %953 = vmatprep.subr.mxu0 0.0
  %954 = vmatpush1.msra.mxu0 0.0
  %955 = vmatprep.subr.mxu0 0.0
  %956 = vmatpush1.msra.mxu0 0.0
  %957 = vmatprep.subr.mxu0 0.0
  %958 = vmatpush1.msra.mxu0 0.0
  %959 = vmatprep.subr.mxu0 0.0
  %960 = vmatpush1.msra.mxu0 0.0
  %961 = vmatprep.subr.mxu0 0.0
  %962 = vmatpush1.msra.mxu0 0.0
  %963 = vmatprep.subr.mxu0 0.0
  %964 = vmatpush1.msra.mxu0 0.0
  %965 = vmatprep.subr.mxu0 0.0
  %966 = vmatpush1.msra.mxu0 0.0
  %967 = vmatprep.mubr.f32.mxu0 0.0
  %968 = vmatmul.mubr.f32.gmra.mrb[0].mxu0 %v898
  %v969 = vpop.f32.mrb[0].mxu0
  %v970 = vadd.f32 %v393, %v969
  %v971 = vpop.f32.mrb[0].mxu0
  %v972 = vadd.f32 %v397, %v971
  %973 = vdwg.mxu0
  %974 = vmatprep.subr.mxu0 0.0
  %975 = vmatpush1.msra.mxu0 %v339
  %976 = vmatprep.subr.mxu0 0.0
  %977 = vmatpush1.msra.mxu0 %v342
  %978 = vmatprep.subr.mxu0 0.0
  %979 = vmatpush1.msra.mxu0 %v345
  %980 = vmatprep.subr.mxu0 0.0
  %981 = vmatpush1.msra.mxu0 %v348
  %982 = vmatprep.subr.mxu0 0.0
  %983 = vmatpush1.msra.mxu0 %v351
  %984 = vmatprep.subr.mxu0 0.0
  %985 = vmatpush1.msra.mxu0 %v354
  %986 = vmatprep.subr.mxu0 0.0
  %987 = vmatpush1.msra.mxu0 %v357
  %988 = vmatprep.subr.mxu0 0.0
  %989 = vmatpush1.msra.mxu0 %v360
  %990 = vmatprep.subr.mxu0 0.0
  %991 = vmatpush1.msra.mxu0 %v363
  %992 = vmatprep.subr.mxu0 0.0
  %993 = vmatpush1.msra.mxu0 %v366
  %994 = vmatprep.subr.mxu0 0.0
  %995 = vmatpush1.msra.mxu0 %v369
  %996 = vmatprep.subr.mxu0 0.0
  %997 = vmatpush1.msra.mxu0 %v372
  %998 = vmatprep.subr.mxu0 0.0
  %999 = vmatpush1.msra.mxu0 %v375
  %1000 = vmatprep.subr.mxu0 0.0
  %1001 = vmatpush1.msra.mxu0 %v378
  %1002 = vmatprep.subr.mxu0 0.0
  %1003 = vmatpush1.msra.mxu0 %v381
  %1004 = vmatprep.subr.mxu0 0.0
  %1005 = vmatpush1.msra.mxu0 %v384
  %1006 = vmatprep.subr.mxu0 0.0
  %1007 = vmatpush1.msra.mxu0 0.0
  %1008 = vmatprep.subr.mxu0 0.0
  %1009 = vmatpush1.msra.mxu0 0.0
  %1010 = vmatprep.subr.mxu0 0.0
  %1011 = vmatpush1.msra.mxu0 0.0
  %1012 = vmatprep.subr.mxu0 0.0
  %1013 = vmatpush1.msra.mxu0 0.0
  %1014 = vmatprep.subr.mxu0 0.0
  %1015 = vmatpush1.msra.mxu0 0.0
  %1016 = vmatprep.subr.mxu0 0.0
  %1017 = vmatpush1.msra.mxu0 0.0
  %1018 = vmatprep.subr.mxu0 0.0
  %1019 = vmatpush1.msra.mxu0 0.0
  %1020 = vmatprep.subr.mxu0 0.0
  %1021 = vmatpush1.msra.mxu0 0.0
  %1022 = vmatprep.subr.mxu0 0.0
  %1023 = vmatpush1.msra.mxu0 0.0
  %1024 = vmatprep.subr.mxu0 0.0
  %1025 = vmatpush1.msra.mxu0 0.0
  %1026 = vmatprep.subr.mxu0 0.0
  %1027 = vmatpush1.msra.mxu0 0.0
  %1028 = vmatprep.subr.mxu0 0.0
  %1029 = vmatpush1.msra.mxu0 0.0
  %1030 = vmatprep.subr.mxu0 0.0
  %1031 = vmatpush1.msra.mxu0 0.0
  %1032 = vmatprep.subr.mxu0 0.0
  %1033 = vmatpush1.msra.mxu0 0.0
  %1034 = vmatprep.subr.mxu0 0.0
  %1035 = vmatpush1.msra.mxu0 0.0
  %1036 = vmatprep.subr.mxu0 0.0
  %1037 = vmatpush1.msra.mxu0 0.0
  %1038 = vmatprep.mubr.f32.mxu0 0.0
  %1039 = vmatmul.mubr.f32.gmra.mrb[0].mxu0 %v898
  %v1040 = vpop.f32.mrb[0].mxu0
  %v1041 = vadd.f32 %v401, %v1040
  %v1042 = vpop.f32.mrb[0].mxu0
  %1043 = vdwg.mxu0
  %v1044 = vadd.f32 %v900, %v970
  %v1045 = vsub.f32 0.0, %v1044
  %v1046 = vmul.f32 %v1045, 1.442695
  %v1047 = vpow.pop %v1046
  %v1048 = vadd.f32 %v1047, 1.0
  %v1049 = vrcp.pop %v1048
  %v1050 = vmul.f32 1.0, %v1049
  %v1051 = vadd.f32 %v901, %v972
  %v1052 = vsub.f32 0.0, %v1051
  %v1053 = vmul.f32 %v1052, 1.442695
  %v1054 = vpow.pop %v1053
  %v1055 = vadd.f32 %v1054, 1.0
  %v1056 = vrcp.pop %v1055
  %v1057 = vmul.f32 1.0, %v1056
  %v1058 = vmul.f32 %v1050, %v1041
  %v1059 = vadd.f32 %v902, %v1058
  %v1060 = vtanh.pop %v1059
  %v1061 = vsub.f32 1.0, %v1057
  %v1062 = vmul.f32 %v1061, %v1060
  %v1063 = vmul.f32 %v1057, %v898
  %v1064 = vadd.f32 %v1062, %v1063
  %1065 = vst [vmem:[%s5 + $0x18] sm:$0xff] %v1064
  %v1066 = vld [vmem:[#allocation2 + $0x60] sm:$0xff]
  %v1067 = vld [vmem:[#allocation2 + $0x68] sm:$0xff]
  %v1068 = vld [vmem:[#allocation2 + $0x70] sm:$0xff]
  %1069 = vmatprep.subr.mxu0 %v338
  %1070 = vmatpush1.msra.mxu0 %v337
  %1071 = vmatprep.subr.mxu0 %v341
  %1072 = vmatpush1.msra.mxu0 %v340
  %1073 = vmatprep.subr.mxu0 %v344
  %1074 = vmatpush1.msra.mxu0 %v343
  %1075 = vmatprep.subr.mxu0 %v347
  %1076 = vmatpush1.msra.mxu0 %v346
  %1077 = vmatprep.subr.mxu0 %v350
  %1078 = vmatpush1.msra.mxu0 %v349
  %1079 = vmatprep.subr.mxu0 %v353
  %1080 = vmatpush1.msra.mxu0 %v352
  %1081 = vmatprep.subr.mxu0 %v356
  %1082 = vmatpush1.msra.mxu0 %v355
  %1083 = vmatprep.subr.mxu0 %v359
  %1084 = vmatpush1.msra.mxu0 %v358
  %1085 = vmatprep.subr.mxu0 %v362
  %1086 = vmatpush1.msra.mxu0 %v361
  %1087 = vmatprep.subr.mxu0 %v365
  %1088 = vmatpush1.msra.mxu0 %v364
  %1089 = vmatprep.subr.mxu0 %v368
  %1090 = vmatpush1.msra.mxu0 %v367
  %1091 = vmatprep.subr.mxu0 %v371
  %1092 = vmatpush1.msra.mxu0 %v370
  %1093 = vmatprep.subr.mxu0 %v374
  %1094 = vmatpush1.msra.mxu0 %v373
  %1095 = vmatprep.subr.mxu0 %v377
  %1096 = vmatpush1.msra.mxu0 %v376
  %1097 = vmatprep.subr.mxu0 %v380
  %1098 = vmatpush1.msra.mxu0 %v379
  %1099 = vmatprep.subr.mxu0 %v383
  %1100 = vmatpush1.msra.mxu0 %v382
  %1101 = vmatprep.subr.mxu0 0.0
  %1102 = vmatpush1.msra.mxu0 0.0
  %1103 = vmatprep.subr.mxu0 0.0
  %1104 = vmatpush1.msra.mxu0 0.0
  %1105 = vmatprep.subr.mxu0 0.0
  %1106 = vmatpush1.msra.mxu0 0.0
  %1107 = vmatprep.subr.mxu0 0.0
  %1108 = vmatpush1.msra.mxu0 0.0
  %1109 = vmatprep.subr.mxu0 0.0
  %1110 = vmatpush1.msra.mxu0 0.0
  %1111 = vmatprep.subr.mxu0 0.0
  %1112 = vmatpush1.msra.mxu0 0.0
  %1113 = vmatprep.subr.mxu0 0.0
  %1114 = vmatpush1.msra.mxu0 0.0
  %1115 = vmatprep.subr.mxu0 0.0
  %1116 = vmatpush1.msra.mxu0 0.0
  %1117 = vmatprep.subr.mxu0 0.0
  %1118 = vmatpush1.msra.mxu0 0.0
  %1119 = vmatprep.subr.mxu0 0.0
  %1120 = vmatpush1.msra.mxu0 0.0
  %1121 = vmatprep.subr.mxu0 0.0
  %1122 = vmatpush1.msra.mxu0 0.0
  %1123 = vmatprep.subr.mxu0 0.0
  %1124 = vmatpush1.msra.mxu0 0.0
  %1125 = vmatprep.subr.mxu0 0.0
  %1126 = vmatpush1.msra.mxu0 0.0
  %1127 = vmatprep.subr.mxu0 0.0
  %1128 = vmatpush1.msra.mxu0 0.0
  %1129 = vmatprep.subr.mxu0 0.0
  %1130 = vmatpush1.msra.mxu0 0.0
  %1131 = vmatprep.subr.mxu0 0.0
  %1132 = vmatpush1.msra.mxu0 0.0
  %1133 = vmatprep.mubr.f32.mxu0 0.0
  %1134 = vmatmul.mubr.f32.gmra.mrb[0].mxu0 %v1064
  %v1135 = vpop.f32.mrb[0].mxu0
  %v1136 = vadd.f32 %v393, %v1135
  %v1137 = vpop.f32.mrb[0].mxu0
  %v1138 = vadd.f32 %v397, %v1137
  %1139 = vdwg.mxu0
  %1140 = vmatprep.subr.mxu0 0.0
  %1141 = vmatpush1.msra.mxu0 %v339
  %1142 = vmatprep.subr.mxu0 0.0
  %1143 = vmatpush1.msra.mxu0 %v342
  %1144 = vmatprep.subr.mxu0 0.0
  %1145 = vmatpush1.msra.mxu0 %v345
  %1146 = vmatprep.subr.mxu0 0.0
  %1147 = vmatpush1.msra.mxu0 %v348
  %1148 = vmatprep.subr.mxu0 0.0
  %1149 = vmatpush1.msra.mxu0 %v351
  %1150 = vmatprep.subr.mxu0 0.0
  %1151 = vmatpush1.msra.mxu0 %v354
  %1152 = vmatprep.subr.mxu0 0.0
  %1153 = vmatpush1.msra.mxu0 %v357
  %1154 = vmatprep.subr.mxu0 0.0
  %1155 = vmatpush1.msra.mxu0 %v360
  %1156 = vmatprep.subr.mxu0 0.0
  %1157 = vmatpush1.msra.mxu0 %v363
  %1158 = vmatprep.subr.mxu0 0.0
  %1159 = vmatpush1.msra.mxu0 %v366
  %1160 = vmatprep.subr.mxu0 0.0
  %1161 = vmatpush1.msra.mxu0 %v369
  %1162 = vmatprep.subr.mxu0 0.0
  %1163 = vmatpush1.msra.mxu0 %v372
  %1164 = vmatprep.subr.mxu0 0.0
  %1165 = vmatpush1.msra.mxu0 %v375
  %1166 = vmatprep.subr.mxu0 0.0
  %1167 = vmatpush1.msra.mxu0 %v378
  %1168 = vmatprep.subr.mxu0 0.0
  %1169 = vmatpush1.msra.mxu0 %v381
  %1170 = vmatprep.subr.mxu0 0.0
  %1171 = vmatpush1.msra.mxu0 %v384
  %1172 = vmatprep.subr.mxu0 0.0
  %1173 = vmatpush1.msra.mxu0 0.0
  %1174 = vmatprep.subr.mxu0 0.0
  %1175 = vmatpush1.msra.mxu0 0.0
  %1176 = vmatprep.subr.mxu0 0.0
  %1177 = vmatpush1.msra.mxu0 0.0
  %1178 = vmatprep.subr.mxu0 0.0
  %1179 = vmatpush1.msra.mxu0 0.0
  %1180 = vmatprep.subr.mxu0 0.0
  %1181 = vmatpush1.msra.mxu0 0.0
  %1182 = vmatprep.subr.mxu0 0.0
  %1183 = vmatpush1.msra.mxu0 0.0
  %1184 = vmatprep.subr.mxu0 0.0
  %1185 = vmatpush1.msra.mxu0 0.0
  %1186 = vmatprep.subr.mxu0 0.0
  %1187 = vmatpush1.msra.mxu0 0.0
  %1188 = vmatprep.subr.mxu0 0.0
  %1189 = vmatpush1.msra.mxu0 0.0
  %1190 = vmatprep.subr.mxu0 0.0
  %1191 = vmatpush1.msra.mxu0 0.0
  %1192 = vmatprep.subr.mxu0 0.0
  %1193 = vmatpush1.msra.mxu0 0.0
  %1194 = vmatprep.subr.mxu0 0.0
  %1195 = vmatpush1.msra.mxu0 0.0
  %1196 = vmatprep.subr.mxu0 0.0
  %1197 = vmatpush1.msra.mxu0 0.0
  %1198 = vmatprep.subr.mxu0 0.0
  %1199 = vmatpush1.msra.mxu0 0.0
  %1200 = vmatprep.subr.mxu0 0.0
  %1201 = vmatpush1.msra.mxu0 0.0
  %1202 = vmatprep.subr.mxu0 0.0
  %1203 = vmatpush1.msra.mxu0 0.0
  %1204 = vmatprep.mubr.f32.mxu0 0.0
  %1205 = vmatmul.mubr.f32.gmra.mrb[0].mxu0 %v1064
  %v1206 = vpop.f32.mrb[0].mxu0
  %v1207 = vadd.f32 %v401, %v1206
  %v1208 = vpop.f32.mrb[0].mxu0
  %1209 = vdwg.mxu0
  %v1210 = vadd.f32 %v1066, %v1136
  %v1211 = vsub.f32 0.0, %v1210
  %v1212 = vmul.f32 %v1211, 1.442695
  %v1213 = vpow.pop %v1212
  %v1214 = vadd.f32 %v1213, 1.0
  %v1215 = vrcp.pop %v1214
  %v1216 = vmul.f32 1.0, %v1215
  %v1217 = vadd.f32 %v1067, %v1138
  %v1218 = vsub.f32 0.0, %v1217
  %v1219 = vmul.f32 %v1218, 1.442695
  %v1220 = vpow.pop %v1219
  %v1221 = vadd.f32 %v1220, 1.0
  %v1222 = vrcp.pop %v1221
  %v1223 = vmul.f32 1.0, %v1222
  %v1224 = vmul.f32 %v1216, %v1207
  %v1225 = vadd.f32 %v1068, %v1224
  %v1226 = vtanh.pop %v1225
  %v1227 = vsub.f32 1.0, %v1223
  %v1228 = vmul.f32 %v1227, %v1226
  %v1229 = vmul.f32 %v1223, %v1064
  %v1230 = vadd.f32 %v1228, %v1229
  %1231 = vst [vmem:[%s5 + $0x20] sm:$0xff] %v1230
  %v1232 = vld [vmem:[#allocation2 + $0x78] sm:$0xff]
  %v1233 = vld [vmem:[#allocation2 + $0x80] sm:$0xff]
  %v1234 = vld [vmem:[#allocation2 + $0x88] sm:$0xff]
  %1235 = vmatprep.subr.mxu0 %v338
  %1236 = vmatpush1.msra.mxu0 %v337
  %1237 = vmatprep.subr.mxu0 %v341
  %1238 = vmatpush1.msra.mxu0 %v340
  %1239 = vmatprep.subr.mxu0 %v344
  %1240 = vmatpush1.msra.mxu0 %v343
  %1241 = vmatprep.subr.mxu0 %v347
  %1242 = vmatpush1.msra.mxu0 %v346
  %1243 = vmatprep.subr.mxu0 %v350
  %1244 = vmatpush1.msra.mxu0 %v349
  %1245 = vmatprep.subr.mxu0 %v353
  %1246 = vmatpush1.msra.mxu0 %v352
  %1247 = vmatprep.subr.mxu0 %v356
  %1248 = vmatpush1.msra.mxu0 %v355
  %1249 = vmatprep.subr.mxu0 %v359
  %1250 = vmatpush1.msra.mxu0 %v358
  %1251 = vmatprep.subr.mxu0 %v362
  %1252 = vmatpush1.msra.mxu0 %v361
  %1253 = vmatprep.subr.mxu0 %v365
  %1254 = vmatpush1.msra.mxu0 %v364
  %1255 = vmatprep.subr.mxu0 %v368
  %1256 = vmatpush1.msra.mxu0 %v367
  %1257 = vmatprep.subr.mxu0 %v371
  %1258 = vmatpush1.msra.mxu0 %v370
  %1259 = vmatprep.subr.mxu0 %v374
  %1260 = vmatpush1.msra.mxu0 %v373
  %1261 = vmatprep.subr.mxu0 %v377
  %1262 = vmatpush1.msra.mxu0 %v376
  %1263 = vmatprep.subr.mxu0 %v380
  %1264 = vmatpush1.msra.mxu0 %v379
  %1265 = vmatprep.subr.mxu0 %v383
  %1266 = vmatpush1.msra.mxu0 %v382
  %1267 = vmatprep.subr.mxu0 0.0
  %1268 = vmatpush1.msra.mxu0 0.0
  %1269 = vmatprep.subr.mxu0 0.0
  %1270 = vmatpush1.msra.mxu0 0.0
  %1271 = vmatprep.subr.mxu0 0.0
  %1272 = vmatpush1.msra.mxu0 0.0
  %1273 = vmatprep.subr.mxu0 0.0
  %1274 = vmatpush1.msra.mxu0 0.0
  %1275 = vmatprep.subr.mxu0 0.0
  %1276 = vmatpush1.msra.mxu0 0.0
  %1277 = vmatprep.subr.mxu0 0.0
  %1278 = vmatpush1.msra.mxu0 0.0
  %1279 = vmatprep.subr.mxu0 0.0
  %1280 = vmatpush1.msra.mxu0 0.0
  %1281 = vmatprep.subr.mxu0 0.0
  %1282 = vmatpush1.msra.mxu0 0.0
  %1283 = vmatprep.subr.mxu0 0.0
  %1284 = vmatpush1.msra.mxu0 0.0
  %1285 = vmatprep.subr.mxu0 0.0
  %1286 = vmatpush1.msra.mxu0 0.0
  %1287 = vmatprep.subr.mxu0 0.0
  %1288 = vmatpush1.msra.mxu0 0.0
  %1289 = vmatprep.subr.mxu0 0.0
  %1290 = vmatpush1.msra.mxu0 0.0
  %1291 = vmatprep.subr.mxu0 0.0
  %1292 = vmatpush1.msra.mxu0 0.0
  %1293 = vmatprep.subr.mxu0 0.0
  %1294 = vmatpush1.msra.mxu0 0.0
  %1295 = vmatprep.subr.mxu0 0.0
  %1296 = vmatpush1.msra.mxu0 0.0
  %1297 = vmatprep.subr.mxu0 0.0
  %1298 = vmatpush1.msra.mxu0 0.0
  %1299 = vmatprep.mubr.f32.mxu0 0.0
  %1300 = vmatmul.mubr.f32.gmra.mrb[0].mxu0 %v1230
  %v1301 = vpop.f32.mrb[0].mxu0
  %v1302 = vadd.f32 %v393, %v1301
  %v1303 = vpop.f32.mrb[0].mxu0
  %v1304 = vadd.f32 %v397, %v1303
  %1305 = vdwg.mxu0
  %1306 = vmatprep.subr.mxu0 0.0
  %1307 = vmatpush1.msra.mxu0 %v339
  %1308 = vmatprep.subr.mxu0 0.0
  %1309 = vmatpush1.msra.mxu0 %v342
  %1310 = vmatprep.subr.mxu0 0.0
  %1311 = vmatpush1.msra.mxu0 %v345
  %1312 = vmatprep.subr.mxu0 0.0
  %1313 = vmatpush1.msra.mxu0 %v348
  %1314 = vmatprep.subr.mxu0 0.0
  %1315 = vmatpush1.msra.mxu0 %v351
  %1316 = vmatprep.subr.mxu0 0.0
  %1317 = vmatpush1.msra.mxu0 %v354
  %1318 = vmatprep.subr.mxu0 0.0
  %1319 = vmatpush1.msra.mxu0 %v357
  %1320 = vmatprep.subr.mxu0 0.0
  %1321 = vmatpush1.msra.mxu0 %v360
  %1322 = vmatprep.subr.mxu0 0.0
  %1323 = vmatpush1.msra.mxu0 %v363
  %1324 = vmatprep.subr.mxu0 0.0
  %1325 = vmatpush1.msra.mxu0 %v366
  %1326 = vmatprep.subr.mxu0 0.0
  %1327 = vmatpush1.msra.mxu0 %v369
  %1328 = vmatprep.subr.mxu0 0.0
  %1329 = vmatpush1.msra.mxu0 %v372
  %1330 = vmatprep.subr.mxu0 0.0
  %1331 = vmatpush1.msra.mxu0 %v375
  %1332 = vmatprep.subr.mxu0 0.0
  %1333 = vmatpush1.msra.mxu0 %v378
  %1334 = vmatprep.subr.mxu0 0.0
  %1335 = vmatpush1.msra.mxu0 %v381
  %1336 = vmatprep.subr.mxu0 0.0
  %1337 = vmatpush1.msra.mxu0 %v384
  %1338 = vmatprep.subr.mxu0 0.0
  %1339 = vmatpush1.msra.mxu0 0.0
  %1340 = vmatprep.subr.mxu0 0.0
  %1341 = vmatpush1.msra.mxu0 0.0
  %1342 = vmatprep.subr.mxu0 0.0
  %1343 = vmatpush1.msra.mxu0 0.0
  %1344 = vmatprep.subr.mxu0 0.0
  %1345 = vmatpush1.msra.mxu0 0.0
  %1346 = vmatprep.subr.mxu0 0.0
  %1347 = vmatpush1.msra.mxu0 0.0
  %1348 = vmatprep.subr.mxu0 0.0
  %1349 = vmatpush1.msra.mxu0 0.0
  %1350 = vmatprep.subr.mxu0 0.0
  %1351 = vmatpush1.msra.mxu0 0.0
  %1352 = vmatprep.subr.mxu0 0.0
  %1353 = vmatpush1.msra.mxu0 0.0
  %1354 = vmatprep.subr.mxu0 0.0
  %1355 = vmatpush1.msra.mxu0 0.0
  %1356 = vmatprep.subr.mxu0 0.0
  %1357 = vmatpush1.msra.mxu0 0.0
  %1358 = vmatprep.subr.mxu0 0.0
  %1359 = vmatpush1.msra.mxu0 0.0
  %1360 = vmatprep.subr.mxu0 0.0
  %1361 = vmatpush1.msra.mxu0 0.0
  %1362 = vmatprep.subr.mxu0 0.0
  %1363 = vmatpush1.msra.mxu0 0.0
  %1364 = vmatprep.subr.mxu0 0.0
  %1365 = vmatpush1.msra.mxu0 0.0
  %1366 = vmatprep.subr.mxu0 0.0
  %1367 = vmatpush1.msra.mxu0 0.0
  %1368 = vmatprep.subr.mxu0 0.0
  %1369 = vmatpush1.msra.mxu0 0.0
  %1370 = vmatprep.mubr.f32.mxu0 0.0
  %1371 = vmatmul.mubr.f32.gmra.mrb[0].mxu0 %v1230
  %v1372 = vpop.f32.mrb[0].mxu0
  %v1373 = vadd.f32 %v401, %v1372
  %v1374 = vpop.f32.mrb[0].mxu0
  %1375 = vdwg.mxu0
  %v1376 = vadd.f32 %v1232, %v1302
  %v1377 = vsub.f32 0.0, %v1376
  %v1378 = vmul.f32 %v1377, 1.442695
  %v1379 = vpow.pop %v1378
  %v1380 = vadd.f32 %v1379, 1.0
  %v1381 = vrcp.pop %v1380
  %v1382 = vmul.f32 1.0, %v1381
  %v1383 = vadd.f32 %v1233, %v1304
  %v1384 = vsub.f32 0.0, %v1383
  %v1385 = vmul.f32 %v1384, 1.442695
  %v1386 = vpow.pop %v1385
  %v1387 = vadd.f32 %v1386, 1.0
  %v1388 = vrcp.pop %v1387
  %v1389 = vmul.f32 1.0, %v1388
  %v1390 = vmul.f32 %v1382, %v1373
  %v1391 = vadd.f32 %v1234, %v1390
  %v1392 = vtanh.pop %v1391
  %v1393 = vsub.f32 1.0, %v1389
  %v1394 = vmul.f32 %v1393, %v1392
  %v1395 = vmul.f32 %v1389, %v1230
  %v1396 = vadd.f32 %v1394, %v1395
  %1397 = vst [vmem:[%s5 + $0x28] sm:$0xff] %v1396
  %v1398 = vld [vmem:[#allocation2 + $0x90] sm:$0xff]
  %v1399 = vld [vmem:[#allocation2 + $0x98] sm:$0xff]
  %v1400 = vld [vmem:[#allocation2 + $0xa0] sm:$0xff]
  %1401 = vmatprep.subr.mxu0 %v338
  %1402 = vmatpush1.msra.mxu0 %v337
  %1403 = vmatprep.subr.mxu0 %v341
  %1404 = vmatpush1.msra.mxu0 %v340
  %1405 = vmatprep.subr.mxu0 %v344
  %1406 = vmatpush1.msra.mxu0 %v343
  %1407 = vmatprep.subr.mxu0 %v347
  %1408 = vmatpush1.msra.mxu0 %v346
  %1409 = vmatprep.subr.mxu0 %v350
  %1410 = vmatpush1.msra.mxu0 %v349
  %1411 = vmatprep.subr.mxu0 %v353
  %1412 = vmatpush1.msra.mxu0 %v352
  %1413 = vmatprep.subr.mxu0 %v356
  %1414 = vmatpush1.msra.mxu0 %v355
  %1415 = vmatprep.subr.mxu0 %v359
  %1416 = vmatpush1.msra.mxu0 %v358
  %1417 = vmatprep.subr.mxu0 %v362
  %1418 = vmatpush1.msra.mxu0 %v361
  %1419 = vmatprep.subr.mxu0 %v365
  %1420 = vmatpush1.msra.mxu0 %v364
  %1421 = vmatprep.subr.mxu0 %v368
  %1422 = vmatpush1.msra.mxu0 %v367
  %1423 = vmatprep.subr.mxu0 %v371
  %1424 = vmatpush1.msra.mxu0 %v370
  %1425 = vmatprep.subr.mxu0 %v374
  %1426 = vmatpush1.msra.mxu0 %v373
  %1427 = vmatprep.subr.mxu0 %v377
  %1428 = vmatpush1.msra.mxu0 %v376
  %1429 = vmatprep.subr.mxu0 %v380
  %1430 = vmatpush1.msra.mxu0 %v379
  %1431 = vmatprep.subr.mxu0 %v383
  %1432 = vmatpush1.msra.mxu0 %v382
  %1433 = vmatprep.subr.mxu0 0.0
  %1434 = vmatpush1.msra.mxu0 0.0
  %1435 = vmatprep.subr.mxu0 0.0
  %1436 = vmatpush1.msra.mxu0 0.0
  %1437 = vmatprep.subr.mxu0 0.0
  %1438 = vmatpush1.msra.mxu0 0.0
  %1439 = vmatprep.subr.mxu0 0.0
  %1440 = vmatpush1.msra.mxu0 0.0
  %1441 = vmatprep.subr.mxu0 0.0
  %1442 = vmatpush1.msra.mxu0 0.0
  %1443 = vmatprep.subr.mxu0 0.0
  %1444 = vmatpush1.msra.mxu0 0.0
  %1445 = vmatprep.subr.mxu0 0.0
  %1446 = vmatpush1.msra.mxu0 0.0
  %1447 = vmatprep.subr.mxu0 0.0
  %1448 = vmatpush1.msra.mxu0 0.0
  %1449 = vmatprep.subr.mxu0 0.0
  %1450 = vmatpush1.msra.mxu0 0.0
  %1451 = vmatprep.subr.mxu0 0.0
  %1452 = vmatpush1.msra.mxu0 0.0
  %1453 = vmatprep.subr.mxu0 0.0
  %1454 = vmatpush1.msra.mxu0 0.0
  %1455 = vmatprep.subr.mxu0 0.0
  %1456 = vmatpush1.msra.mxu0 0.0
  %1457 = vmatprep.subr.mxu0 0.0
  %1458 = vmatpush1.msra.mxu0 0.0
  %1459 = vmatprep.subr.mxu0 0.0
  %1460 = vmatpush1.msra.mxu0 0.0
  %1461 = vmatprep.subr.mxu0 0.0
  %1462 = vmatpush1.msra.mxu0 0.0
  %1463 = vmatprep.subr.mxu0 0.0
  %1464 = vmatpush1.msra.mxu0 0.0
  %1465 = vmatprep.mubr.f32.mxu0 0.0
  %1466 = vmatmul.mubr.f32.gmra.mrb[0].mxu0 %v1396
  %v1467 = vpop.f32.mrb[0].mxu0
  %v1468 = vadd.f32 %v393, %v1467
  %v1469 = vpop.f32.mrb[0].mxu0
  %v1470 = vadd.f32 %v397, %v1469
  %1471 = vdwg.mxu0
  %1472 = vmatprep.subr.mxu0 0.0
  %1473 = vmatpush1.msra.mxu0 %v339
  %1474 = vmatprep.subr.mxu0 0.0
  %1475 = vmatpush1.msra.mxu0 %v342
  %1476 = vmatprep.subr.mxu0 0.0
  %1477 = vmatpush1.msra.mxu0 %v345
  %1478 = vmatprep.subr.mxu0 0.0
  %1479 = vmatpush1.msra.mxu0 %v348
  %1480 = vmatprep.subr.mxu0 0.0
  %1481 = vmatpush1.msra.mxu0 %v351
  %1482 = vmatprep.subr.mxu0 0.0
  %1483 = vmatpush1.msra.mxu0 %v354
  %1484 = vmatprep.subr.mxu0 0.0
  %1485 = vmatpush1.msra.mxu0 %v357
  %1486 = vmatprep.subr.mxu0 0.0
  %1487 = vmatpush1.msra.mxu0 %v360
  %1488 = vmatprep.subr.mxu0 0.0
  %1489 = vmatpush1.msra.mxu0 %v363
  %1490 = vmatprep.subr.mxu0 0.0
  %1491 = vmatpush1.msra.mxu0 %v366
  %1492 = vmatprep.subr.mxu0 0.0
  %1493 = vmatpush1.msra.mxu0 %v369
  %1494 = vmatprep.subr.mxu0 0.0
  %1495 = vmatpush1.msra.mxu0 %v372
  %1496 = vmatprep.subr.mxu0 0.0
  %1497 = vmatpush1.msra.mxu0 %v375
  %1498 = vmatprep.subr.mxu0 0.0
  %1499 = vmatpush1.msra.mxu0 %v378
  %1500 = vmatprep.subr.mxu0 0.0
  %1501 = vmatpush1.msra.mxu0 %v381
  %1502 = vmatprep.subr.mxu0 0.0
  %1503 = vmatpush1.msra.mxu0 %v384
  %1504 = vmatprep.subr.mxu0 0.0
  %1505 = vmatpush1.msra.mxu0 0.0
  %1506 = vmatprep.subr.mxu0 0.0
  %1507 = vmatpush1.msra.mxu0 0.0
  %1508 = vmatprep.subr.mxu0 0.0
  %1509 = vmatpush1.msra.mxu0 0.0
  %1510 = vmatprep.subr.mxu0 0.0
  %1511 = vmatpush1.msra.mxu0 0.0
  %1512 = vmatprep.subr.mxu0 0.0
  %1513 = vmatpush1.msra.mxu0 0.0
  %1514 = vmatprep.subr.mxu0 0.0
  %1515 = vmatpush1.msra.mxu0 0.0
  %1516 = vmatprep.subr.mxu0 0.0
  %1517 = vmatpush1.msra.mxu0 0.0
  %1518 = vmatprep.subr.mxu0 0.0
  %1519 = vmatpush1.msra.mxu0 0.0
  %1520 = vmatprep.subr.mxu0 0.0
  %1521 = vmatpush1.msra.mxu0 0.0
  %1522 = vmatprep.subr.mxu0 0.0
  %1523 = vmatpush1.msra.mxu0 0.0
  %1524 = vmatprep.subr.mxu0 0.0
  %1525 = vmatpush1.msra.mxu0 0.0
  %1526 = vmatprep.subr.mxu0 0.0
  %1527 = vmatpush1.msra.mxu0 0.0
  %1528 = vmatprep.subr.mxu0 0.0
  %1529 = vmatpush1.msra.mxu0 0.0
  %1530 = vmatprep.subr.mxu0 0.0
  %1531 = vmatpush1.msra.mxu0 0.0
  %1532 = vmatprep.subr.mxu0 0.0
  %1533 = vmatpush1.msra.mxu0 0.0
  %1534 = vmatprep.subr.mxu0 0.0
  %1535 = vmatpush1.msra.mxu0 0.0
  %1536 = vmatprep.mubr.f32.mxu0 0.0
  %1537 = vmatmul.mubr.f32.gmra.mrb[0].mxu0 %v1396
  %v1538 = vpop.f32.mrb[0].mxu0
  %v1539 = vadd.f32 %v401, %v1538
  %v1540 = vpop.f32.mrb[0].mxu0
  %1541 = vdwg.mxu0
  %v1542 = vadd.f32 %v1398, %v1468
  %v1543 = vsub.f32 0.0, %v1542
  %v1544 = vmul.f32 %v1543, 1.442695
  %v1545 = vpow.pop %v1544
  %v1546 = vadd.f32 %v1545, 1.0
  %v1547 = vrcp.pop %v1546
  %v1548 = vmul.f32 1.0, %v1547
  %v1549 = vadd.f32 %v1399, %v1470
  %v1550 = vsub.f32 0.0, %v1549
  %v1551 = vmul.f32 %v1550, 1.442695
  %v1552 = vpow.pop %v1551
  %v1553 = vadd.f32 %v1552, 1.0
  %v1554 = vrcp.pop %v1553
  %v1555 = vmul.f32 1.0, %v1554
  %v1556 = vmul.f32 %v1548, %v1539
  %v1557 = vadd.f32 %v1400, %v1556
  %v1558 = vtanh.pop %v1557
  %v1559 = vsub.f32 1.0, %v1555
  %v1560 = vmul.f32 %v1559, %v1558
  %v1561 = vmul.f32 %v1555, %v1396
  %v1562 = vadd.f32 %v1560, %v1561
  %1563 = vst [vmem:[%s5 + $0x30] sm:$0xff] %v1562
  %v1564 = vld [vmem:[#allocation2 + $0xa8] sm:$0xff]
  %v1565 = vld [vmem:[#allocation2 + $0xb0] sm:$0xff]
  %v1566 = vld [vmem:[#allocation2 + $0xb8] sm:$0xff]
  %1567 = vmatprep.subr.mxu0 %v338
  %1568 = vmatpush1.msra.mxu0 %v337
  %1569 = vmatprep.subr.mxu0 %v341
  %1570 = vmatpush1.msra.mxu0 %v340
  %1571 = vmatprep.subr.mxu0 %v344
  %1572 = vmatpush1.msra.mxu0 %v343
  %1573 = vmatprep.subr.mxu0 %v347
  %1574 = vmatpush1.msra.mxu0 %v346
  %1575 = vmatprep.subr.mxu0 %v350
  %1576 = vmatpush1.msra.mxu0 %v349
  %1577 = vmatprep.subr.mxu0 %v353
  %1578 = vmatpush1.msra.mxu0 %v352
  %1579 = vmatprep.subr.mxu0 %v356
  %1580 = vmatpush1.msra.mxu0 %v355
  %1581 = vmatprep.subr.mxu0 %v359
  %1582 = vmatpush1.msra.mxu0 %v358
  %1583 = vmatprep.subr.mxu0 %v362
  %1584 = vmatpush1.msra.mxu0 %v361
  %1585 = vmatprep.subr.mxu0 %v365
  %1586 = vmatpush1.msra.mxu0 %v364
  %1587 = vmatprep.subr.mxu0 %v368
  %1588 = vmatpush1.msra.mxu0 %v367
  %1589 = vmatprep.subr.mxu0 %v371
  %1590 = vmatpush1.msra.mxu0 %v370
  %1591 = vmatprep.subr.mxu0 %v374
  %1592 = vmatpush1.msra.mxu0 %v373
  %1593 = vmatprep.subr.mxu0 %v377
  %1594 = vmatpush1.msra.mxu0 %v376
  %1595 = vmatprep.subr.mxu0 %v380
  %1596 = vmatpush1.msra.mxu0 %v379
  %1597 = vmatprep.subr.mxu0 %v383
  %1598 = vmatpush1.msra.mxu0 %v382
  %1599 = vmatprep.subr.mxu0 0.0
  %1600 = vmatpush1.msra.mxu0 0.0
  %1601 = vmatprep.subr.mxu0 0.0
  %1602 = vmatpush1.msra.mxu0 0.0
  %1603 = vmatprep.subr.mxu0 0.0
  %1604 = vmatpush1.msra.mxu0 0.0
  %1605 = vmatprep.subr.mxu0 0.0
  %1606 = vmatpush1.msra.mxu0 0.0
  %1607 = vmatprep.subr.mxu0 0.0
  %1608 = vmatpush1.msra.mxu0 0.0
  %1609 = vmatprep.subr.mxu0 0.0
  %1610 = vmatpush1.msra.mxu0 0.0
  %1611 = vmatprep.subr.mxu0 0.0
  %1612 = vmatpush1.msra.mxu0 0.0
  %1613 = vmatprep.subr.mxu0 0.0
  %1614 = vmatpush1.msra.mxu0 0.0
  %1615 = vmatprep.subr.mxu0 0.0
  %1616 = vmatpush1.msra.mxu0 0.0
  %1617 = vmatprep.subr.mxu0 0.0
  %1618 = vmatpush1.msra.mxu0 0.0
  %1619 = vmatprep.subr.mxu0 0.0
  %1620 = vmatpush1.msra.mxu0 0.0
  %1621 = vmatprep.subr.mxu0 0.0
  %1622 = vmatpush1.msra.mxu0 0.0
  %1623 = vmatprep.subr.mxu0 0.0
  %1624 = vmatpush1.msra.mxu0 0.0
  %1625 = vmatprep.subr.mxu0 0.0
  %1626 = vmatpush1.msra.mxu0 0.0
  %1627 = vmatprep.subr.mxu0 0.0
  %1628 = vmatpush1.msra.mxu0 0.0
  %1629 = vmatprep.subr.mxu0 0.0
  %1630 = vmatpush1.msra.mxu0 0.0
  %1631 = vmatprep.mubr.f32.mxu0 0.0
  %1632 = vmatmul.mubr.f32.gmra.mrb[0].mxu0 %v1562
  %v1633 = vpop.f32.mrb[0].mxu0
  %v1634 = vadd.f32 %v393, %v1633
  %v1635 = vpop.f32.mrb[0].mxu0
  %v1636 = vadd.f32 %v397, %v1635
  %1637 = vdwg.mxu0
  %1638 = vmatprep.subr.mxu0 0.0
  %1639 = vmatpush1.msra.mxu0 %v339
  %1640 = vmatprep.subr.mxu0 0.0
  %1641 = vmatpush1.msra.mxu0 %v342
  %1642 = vmatprep.subr.mxu0 0.0
  %1643 = vmatpush1.msra.mxu0 %v345
  %1644 = vmatprep.subr.mxu0 0.0
  %1645 = vmatpush1.msra.mxu0 %v348
  %1646 = vmatprep.subr.mxu0 0.0
  %1647 = vmatpush1.msra.mxu0 %v351
  %1648 = vmatprep.subr.mxu0 0.0
  %1649 = vmatpush1.msra.mxu0 %v354
  %1650 = vmatprep.subr.mxu0 0.0
  %1651 = vmatpush1.msra.mxu0 %v357
  %1652 = vmatprep.subr.mxu0 0.0
  %1653 = vmatpush1.msra.mxu0 %v360
  %1654 = vmatprep.subr.mxu0 0.0
  %1655 = vmatpush1.msra.mxu0 %v363
  %1656 = vmatprep.subr.mxu0 0.0
  %1657 = vmatpush1.msra.mxu0 %v366
  %1658 = vmatprep.subr.mxu0 0.0
  %1659 = vmatpush1.msra.mxu0 %v369
  %1660 = vmatprep.subr.mxu0 0.0
  %1661 = vmatpush1.msra.mxu0 %v372
  %1662 = vmatprep.subr.mxu0 0.0
  %1663 = vmatpush1.msra.mxu0 %v375
  %1664 = vmatprep.subr.mxu0 0.0
  %1665 = vmatpush1.msra.mxu0 %v378
  %1666 = vmatprep.subr.mxu0 0.0
  %1667 = vmatpush1.msra.mxu0 %v381
  %1668 = vmatprep.subr.mxu0 0.0
  %1669 = vmatpush1.msra.mxu0 %v384
  %1670 = vmatprep.subr.mxu0 0.0
  %1671 = vmatpush1.msra.mxu0 0.0
  %1672 = vmatprep.subr.mxu0 0.0
  %1673 = vmatpush1.msra.mxu0 0.0
  %1674 = vmatprep.subr.mxu0 0.0
  %1675 = vmatpush1.msra.mxu0 0.0
  %1676 = vmatprep.subr.mxu0 0.0
  %1677 = vmatpush1.msra.mxu0 0.0
  %1678 = vmatprep.subr.mxu0 0.0
  %1679 = vmatpush1.msra.mxu0 0.0
  %1680 = vmatprep.subr.mxu0 0.0
  %1681 = vmatpush1.msra.mxu0 0.0
  %1682 = vmatprep.subr.mxu0 0.0
  %1683 = vmatpush1.msra.mxu0 0.0
  %1684 = vmatprep.subr.mxu0 0.0
  %1685 = vmatpush1.msra.mxu0 0.0
  %1686 = vmatprep.subr.mxu0 0.0
  %1687 = vmatpush1.msra.mxu0 0.0
  %1688 = vmatprep.subr.mxu0 0.0
  %1689 = vmatpush1.msra.mxu0 0.0
  %1690 = vmatprep.subr.mxu0 0.0
  %1691 = vmatpush1.msra.mxu0 0.0
  %1692 = vmatprep.subr.mxu0 0.0
  %1693 = vmatpush1.msra.mxu0 0.0
  %1694 = vmatprep.subr.mxu0 0.0
  %1695 = vmatpush1.msra.mxu0 0.0
  %1696 = vmatprep.subr.mxu0 0.0
  %1697 = vmatpush1.msra.mxu0 0.0
  %1698 = vmatprep.subr.mxu0 0.0
  %1699 = vmatpush1.msra.mxu0 0.0
  %1700 = vmatprep.subr.mxu0 0.0
  %1701 = vmatpush1.msra.mxu0 0.0
  %1702 = vmatprep.mubr.f32.mxu0 0.0
  %1703 = vmatmul.mubr.f32.gmra.mrb[0].mxu0 %v1562
  %v1704 = vpop.f32.mrb[0].mxu0
  %v1705 = vadd.f32 %v401, %v1704
  %v1706 = vpop.f32.mrb[0].mxu0
  %1707 = vdwg.mxu0
  %v1708 = vadd.f32 %v1564, %v1634
  %v1709 = vsub.f32 0.0, %v1708
  %v1710 = vmul.f32 %v1709, 1.442695
  %v1711 = vpow.pop %v1710
  %v1712 = vadd.f32 %v1711, 1.0
  %v1713 = vrcp.pop %v1712
  %v1714 = vmul.f32 1.0, %v1713
  %v1715 = vadd.f32 %v1565, %v1636
  %v1716 = vsub.f32 0.0, %v1715
  %v1717 = vmul.f32 %v1716, 1.442695
  %v1718 = vpow.pop %v1717
  %v1719 = vadd.f32 %v1718, 1.0
  %v1720 = vrcp.pop %v1719
  %v1721 = vmul.f32 1.0, %v1720
  %v1722 = vmul.f32 %v1714, %v1705
  %v1723 = vadd.f32 %v1566, %v1722
  %v1724 = vtanh.pop %v1723
  %v1725 = vsub.f32 1.0, %v1721
  %v1726 = vmul.f32 %v1725, %v1724
  %v1727 = vmul.f32 %v1721, %v1562
  %v1728 = vadd.f32 %v1726, %v1727
  %1729 = vst [vmem:[%s5 + $0x38] sm:$0xff] %v1728
  %1730 = vst [vmem:[%s6] sm:$0xff] %v1728
  // Predicated region
  $region22: #{encoder_rnn_forward.1} parent=0 // pred_check
    _
  $region23: #{encoder_rnn_forward.1} parent=0 // pred_check_branch
    %1732 = sbr.rel (0) target = $region25
  $region24: #{encoder_rnn_forward.1} parent=0 // pred_region
    _
  $region25: #{encoder_rnn_forward.1} parent=0 // pred_fallthru
    _
  // Predicated region
  $region26: #{encoder_rnn_forward.1} parent=0 // pred_check
    _
  $region27: #{encoder_rnn_forward.1} parent=0 // pred_check_branch
    %1734 = sbr.rel (0) target = $region29
  $region28: #{encoder_rnn_forward.1} parent=0 // pred_region
    _
  $region29: #{encoder_rnn_forward.1} parent=0 // pred_fallthru
    _
  // Predicated region
  $region30: #{encoder_rnn_forward.1} parent=0 // pred_check
    _
  $region31: #{encoder_rnn_forward.1} parent=0 // pred_check_branch
    %1736 = sbr.rel (0) target = $region33
  $region32: #{encoder_rnn_forward.1} parent=0 // pred_region
    _
  $region33: #{encoder_rnn_forward.1} parent=0 // pred_fallthru
    _
  // Predicated region
  $region34: #{encoder_rnn_forward.1} parent=0 // pred_check
    _
  $region35: #{encoder_rnn_forward.1} parent=0 // pred_check_branch
    %1738 = sbr.rel (0) target = $region37
  $region36: #{encoder_rnn_forward.1} parent=0 // pred_region
    _
  $region37: #{encoder_rnn_forward.1} parent=0 // pred_fallthru
    _

</llo_original>
